<compile_context>
chip_gen: v7x
topology: tpu7x:2x2x1
jax: 0.10.0
libtpu: 0.0.40
codegen_flags: <defaults>
</compile_context>

<pallas_src>
import functools
import numpy as np

import jax
import jax.numpy as jnp
from jax.experimental import pallas as pl
from jax.experimental.pallas import tpu as pltpu


# ----------------------------------------------------------------------------
# Pallas kernel: full Attention block forward for one (N, H) graph-block.
# ----------------------------------------------------------------------------
def attention_kernel(gid_col_ref, gid_row_ref, h_ref, win_ref, wslab_ref,
                     vec_ref, out_ref, attn_buf, *, num_heads, head_dim):
    f32 = jnp.float32
    bf16 = jnp.bfloat16
    H = num_heads * head_dim

    h0 = h_ref[...].astype(f32)                            # (N, H)

    # Additive mask bias from per-node graph ids, computed once (not per head).
    # -1e9 underflows to 0 after exp (matches -inf attn_mask), NaN-safe.
    neq = gid_col_ref[...] != gid_row_ref[...]              # (N,1) vs (1,N) -> (N,N)
    mask_bias = jnp.where(neq, f32(-1e9), f32(0.0))         # (N, N) f32

    # Packed bias / LayerNorm vector slab (each row is (1, H)).
    ln0w = vec_ref[0:1, :]
    ln0b = vec_ref[1:2, :]
    bq   = vec_ref[2:3, :]      # already scaled by 1/sqrt(head_dim)
    bk   = vec_ref[3:4, :]
    bv   = vec_ref[4:5, :]
    bo   = vec_ref[5:6, :]
    ln1w = vec_ref[6:7, :]
    ln1b = vec_ref[7:8, :]
    b1   = vec_ref[8:9, :]
    b2   = vec_ref[9:10, :]

    # --- LayerNorm 0 (eps = 1e-5, torch default) ---
    mu = jnp.mean(h0, axis=-1, keepdims=True)
    var = jnp.mean(jnp.square(h0 - mu), axis=-1, keepdims=True)
    hn = (h0 - mu) * jax.lax.rsqrt(var + 1e-5) * ln0w + ln0b

    # --- Fused QKV projection (bf16 operands, f32 accumulate) ---
    qkv = jnp.dot(hn.astype(bf16), win_ref[...],
                  preferred_element_type=f32)                # (N, 3H)
    q = (qkv[:, 0:H]     + bq).astype(bf16)                  # scale folded in
    k = (qkv[:, H:2 * H] + bk).astype(bf16)
    v = (qkv[:, 2 * H:]  + bv).astype(bf16)

    w_slab = wslab_ref[...]                                  # (3H, H) bf16
    wo = w_slab[0:H, :]
    w1 = w_slab[H:2 * H, :]
    w2 = w_slab[2 * H:, :]

    # --- Multi-head self-attention (attn dropout identity in eval mode) ---
    # Per-head output is written into lane-offset columns of a VMEM scratch;
    # the out-projection is a single K=H matmul after the loop.
    for hh in range(num_heads):                              # static, small
        lo = hh * head_dim
        hi = lo + head_dim
        s = jax.lax.dot_general(q[:, lo:hi], k[:, lo:hi],
                                (((1,), (1,)), ((), ())),
                                preferred_element_type=f32)  # (N, N)
        s = s + mask_bias
        s = s - jnp.max(s, axis=-1, keepdims=True)
        p = jnp.exp(s)
        p = p * pl.reciprocal(jnp.sum(p, axis=-1, keepdims=True), approx=True)
        head_out = jnp.dot(p.astype(bf16), v[:, lo:hi],
                           preferred_element_type=f32)       # (N, dh) f32
        attn_buf[:, lo:hi] = head_out                        # lane-offset write

    attn = jnp.dot(attn_buf[...].astype(bf16), wo,
                   preferred_element_type=f32)               # one (N,H)x(H,H)
    h1 = attn + bo + h0                                      # out-proj bias + residual

    # --- LayerNorm 1 + FFN: Linear -> SiLU -> Dropout(eval) -> Linear ---
    mu1 = jnp.mean(h1, axis=-1, keepdims=True)
    var1 = jnp.mean(jnp.square(h1 - mu1), axis=-1, keepdims=True)
    hn1 = (h1 - mu1) * jax.lax.rsqrt(var1 + 1e-5) * ln1w + ln1b
    z = jnp.dot(hn1.astype(bf16), w1, preferred_element_type=f32) + b1
    z = z * jax.nn.sigmoid(z)                                # SiLU
    z = jnp.dot(z.astype(bf16), w2, preferred_element_type=f32) + b2
    out_ref[...] = (z + h1).astype(out_ref.dtype)            # residual


# ----------------------------------------------------------------------------
# Wrapper: grid over B independent graph-blocks; weights stay VMEM-resident.
# ----------------------------------------------------------------------------
def attention_forward(h, graph_idx, packed_params, num_heads):
    """h: (N, H) or (B, N, H); graph_idx: (N,) or (B, N) int graph ids."""
    squeeze = (h.ndim == 2)
    if squeeze:
        h = h[None]
        graph_idx = graph_idx[None]
    B, N, H = h.shape
    head_dim = H // num_heads
    w_in, w_slab, vec_slab = packed_params

    gid = jnp.asarray(graph_idx, jnp.int32)
    gid_col = gid[:, :, None]                                # (B, N, 1)
    gid_row = gid[:, None, :]                                # (B, 1, N)

    kernel = functools.partial(attention_kernel,
                               num_heads=num_heads, head_dim=head_dim)
    out = pl.pallas_call(
        kernel,
        out_shape=jax.ShapeDtypeStruct((B, N, H), jnp.float32),
        grid_spec=pltpu.PrefetchScalarGridSpec(
            num_scalar_prefetch=0,
            grid=(B,),
            in_specs=[
                pl.BlockSpec((None, N, 1), lambda b: (b, 0, 0)),   # graph ids (col)
                pl.BlockSpec((None, 1, N), lambda b: (b, 0, 0)),   # graph ids (row)
                pl.BlockSpec((None, N, H), lambda b: (b, 0, 0)),   # h block
                pl.BlockSpec((H, 3 * H),   lambda b: (0, 0)),      # in-proj weight
                pl.BlockSpec((3 * H, H),   lambda b: (0, 0)),      # [Wo;W1;W2]
                pl.BlockSpec((10, H),      lambda b: (0, 0)),      # bias/LN vectors
            ],
            out_specs=pl.BlockSpec((None, N, H), lambda b: (b, 0, 0)),
            scratch_shapes=[pltpu.VMEM((N, H), jnp.float32)],      # head-out buffer
        ),
        compiler_params=pltpu.CompilerParams(
            dimension_semantics=("parallel",)),                    # v7x: 2 TCs
    )(gid_col, gid_row, h, w_in, w_slab, vec_slab)
    return out[0] if squeeze else out


# ----------------------------------------------------------------------------
# Parameter initialization (deterministic, torch-Linear-style uniform init).
# ----------------------------------------------------------------------------
def init_params(key, hidden):
    ks = jax.random.split(key, 4)

    def linear(k, fan_in, fan_out):
        bound = 1.0 / np.sqrt(fan_in)
        kw, kb = jax.random.split(k)
        w = jax.random.uniform(kw, (fan_out, fan_in), jnp.float32, -bound, bound)
        b = jax.random.uniform(kb, (fan_out,), jnp.float32, -bound, bound)
        return w, b

    in_proj_w, in_proj_b = linear(ks[0], hidden, 3 * hidden)   # mha.in_proj
    out_proj_w, out_proj_b = linear(ks[1], hidden, hidden)     # mha.out_proj
    ffn_w1, ffn_b1 = linear(ks[2], hidden, hidden)             # ffn[0]
    ffn_w2, ffn_b2 = linear(ks[3], hidden, hidden)             # ffn[3]

    ln0_w = jnp.ones((hidden,), jnp.float32)
    ln0_b = jnp.zeros((hidden,), jnp.float32)
    ln1_w = jnp.ones((hidden,), jnp.float32)
    ln1_b = jnp.zeros((hidden,), jnp.float32)

    # TODO(synk): the power_to_head / torch.matrix_power branch in the
    # reference forward is dead code (its result never reaches the output),
    # so its parameters and computation are omitted here.
    return (ln0_w, ln0_b, in_proj_w, in_proj_b, out_proj_w, out_proj_b,
            ln1_w, ln1_b, ffn_w1, ffn_b1, ffn_w2, ffn_b2)


def pack_kernel_params(raw_params, hidden, num_heads):
    """Packs the raw tensors into 3 kernel-ready slabs (bf16 weights)."""
    (ln0_w, ln0_b, in_proj_w, in_proj_b, out_proj_w, out_proj_b,
     ln1_w, ln1_b, ffn_w1, ffn_b1, ffn_w2, ffn_b2) = raw_params
    H = hidden
    head_dim = H // num_heads
    scale = jnp.float32(1.0 / np.sqrt(head_dim))

    # Fused in-proj weight (in, out) with softmax scale folded into Q columns.
    w_in = in_proj_w.T                                   # (H, 3H) = [Wq|Wk|Wv]
    w_in = w_in.at[:, :H].multiply(scale)
    b_in = in_proj_b.at[:H].multiply(scale)              # (3H,)

    # Row-stacked [Wo; W1; W2], each pre-transposed to (in, out).
    w_slab = jnp.concatenate([out_proj_w.T, ffn_w1.T, ffn_w2.T], axis=0)  # (3H,H)

    # Bias / LayerNorm vector slab, one row per (1, H) vector.
    vec_slab = jnp.stack([ln0_w, ln0_b,
                          b_in[:H], b_in[H:2 * H], b_in[2 * H:],
                          out_proj_b, ln1_w, ln1_b, ffn_b1, ffn_b2],
                         axis=0).astype(jnp.float32)      # (10, H)

    return (w_in.astype(jnp.bfloat16),
            w_slab.astype(jnp.bfloat16),
            vec_slab)


# ----------------------------------------------------------------------------
# Pure-JAX reference (for a sanity check of the kernel), one (N, H) block.
# ----------------------------------------------------------------------------
def reference_forward(h, mask_f, raw_params, num_heads):
    (ln0w, ln0b, in_w, in_b, out_w, out_b,
     ln1w, ln1b, w1, b1, w2, b2) = raw_params
    N, H = h.shape
    dh = H // num_heads

    def ln(x, w, b):
        mu = x.mean(-1, keepdims=True)
        var = ((x - mu) ** 2).mean(-1, keepdims=True)
        return (x - mu) / jnp.sqrt(var + 1e-5) * w + b

    h0 = h
    hn = ln(h, ln0w, ln0b)
    q = (hn @ in_w[:H].T + in_b[:H]).reshape(N, num_heads, dh).transpose(1, 0, 2)
    k = (hn @ in_w[H:2 * H].T + in_b[H:2 * H]).reshape(N, num_heads, dh).transpose(1, 0, 2)
    v = (hn @ in_w[2 * H:].T + in_b[2 * H:]).reshape(N, num_heads, dh).transpose(1, 0, 2)
    s = jnp.einsum('hqd,hkd->hqk', q, k) / np.sqrt(dh)
    s = jnp.where(mask_f[None] > 0.5, -jnp.inf, s)
    p = jax.nn.softmax(s, axis=-1)
    o = jnp.einsum('hqk,hkd->hqd', p, v).transpose(1, 0, 2).reshape(N, H)
    h1 = o @ out_w.T + out_b + h0
    hn1 = ln(h1, ln1w, ln1b)
    z = jax.nn.silu(hn1 @ w1.T + b1) @ w2.T + b2
    return z + h1


if __name__ == "__main__":
    hidden, num_heads = 32, 4
    # Batch of B=4 independent graph-blocks, each a DGL-style batched graph of
    # N=16 nodes (different intra-block graph partitions).  grid=(B,)
    # amortizes the per-call launch/DMA overhead and shards across v7x's 2 TCs.
    partitions = [[6, 10], [4, 12], [16], [8, 8]]
    N = 16
    B = len(partitions)

    # TODO(synk): dgl.DGLGraph plumbing has no Pallas equivalent; the graph
    # batching structure is represented directly by per-node graph ids.
    gid_np = np.stack([np.repeat(np.arange(len(p)), p) for p in partitions])
    graph_idx = jnp.asarray(gid_np, jnp.int32)                 # (B, N)

    key = jax.random.PRNGKey(0)
    k_h, k_par = jax.random.split(key)
    h = jax.random.normal(k_h, (B, N, hidden), jnp.float32)

    raw_params = init_params(k_par, hidden)
    packed_params = pack_kernel_params(raw_params, hidden, num_heads)

    out = attention_forward(h, graph_idx, packed_params, num_heads)
    out = jax.block_until_ready(out)
    assert out.shape == (B, N, hidden) and out.dtype == jnp.float32

    with jax.default_matmul_precision("highest"):
        for b in range(B):
            mask_b = jnp.asarray(gid_np[b][None, :] != gid_np[b][:, None],
                                 jnp.float32)
            ref_b = reference_forward(h[b], mask_b, raw_params, num_heads)
            np.testing.assert_allclose(np.asarray(out[b]), np.asarray(ref_b),
                                       rtol=2e-2, atol=2e-2)
    print("KERNEL_OK")
</pallas_src>

<mosaic_0001>
module attributes {stable_mosaic.version = 11 : i64} {
  func.func @attention_kernel(%arg0: i32, %arg1: memref<1x16x1xi32, #tpu.memory_space<vmem>>, %arg2: memref<1x1x16xi32, #tpu.memory_space<vmem>>, %arg3: memref<1x16x32xf32, #tpu.memory_space<vmem>>, %arg4: memref<32x96xbf16, #tpu.memory_space<vmem>>, %arg5: memref<96x32xbf16, #tpu.memory_space<vmem>>, %arg6: memref<10x32xf32, #tpu.memory_space<vmem>>, %arg7: memref<1x16x32xf32, #tpu.memory_space<vmem>>, %arg8: memref<16x32xf32, #tpu.memory_space<vmem>>) attributes {dimension_semantics = [#tpu.dimension_semantics<parallel>], iteration_bounds = array<i64: 4>, scalar_prefetch = 0 : i64, scratch_operands = 1 : i64, tpu.core_type = #tpu.core_type<tc>, window_params = [{transform_indices = @transform_0, window_bounds = array<i64: 1, 16, 1>}, {transform_indices = @transform_1, window_bounds = array<i64: 1, 1, 16>}, {transform_indices = @transform_2, window_bounds = array<i64: 1, 16, 32>}, {pipeline_mode = #tpu.pipeline_mode<synchronous>, transform_indices = @transform_3, window_bounds = array<i64: 32, 96>}, {pipeline_mode = #tpu.pipeline_mode<synchronous>, transform_indices = @transform_4, window_bounds = array<i64: 96, 32>}, {pipeline_mode = #tpu.pipeline_mode<synchronous>, transform_indices = @transform_5, window_bounds = array<i64: 10, 32>}, {transform_indices = @transform_6, window_bounds = array<i64: 1, 16, 32>}]} {
    %c0 = arith.constant 0 : index
    %c0_0 = arith.constant 0 : index
    %c0_1 = arith.constant 0 : index
    %0 = vector.load %arg3[%c0, %c0_0, %c0_1] : memref<1x16x32xf32, #tpu.memory_space<vmem>>, vector<1x16x32xf32>
    %1 = vector.shape_cast %0 : vector<1x16x32xf32> to vector<16x32xf32>
    %c0_2 = arith.constant 0 : index
    %c0_3 = arith.constant 0 : index
    %c0_4 = arith.constant 0 : index
    %2 = vector.load %arg1[%c0_2, %c0_3, %c0_4] : memref<1x16x1xi32, #tpu.memory_space<vmem>>, vector<1x16x1xi32>
    %3 = vector.shape_cast %2 : vector<1x16x1xi32> to vector<16x1xi32>
    %c0_5 = arith.constant 0 : index
    %c0_6 = arith.constant 0 : index
    %c0_7 = arith.constant 0 : index
    %4 = vector.load %arg2[%c0_5, %c0_6, %c0_7] : memref<1x1x16xi32, #tpu.memory_space<vmem>>, vector<1x1x16xi32>
    %5 = vector.shape_cast %4 : vector<1x1x16xi32> to vector<1x16xi32>
    %6 = vector.broadcast %3 : vector<16x1xi32> to vector<16x16xi32>
    %7 = vector.broadcast %5 : vector<1x16xi32> to vector<16x16xi32>
    %8 = arith.cmpi ne, %6, %7 : vector<16x16xi32>
    %cst = arith.constant -1.000000e+09 : f32
    %cst_8 = arith.constant 0.000000e+00 : f32
    %9 = vector.broadcast %cst : f32 to vector<16x16xf32>
    %10 = vector.broadcast %cst_8 : f32 to vector<16x16xf32>
    %11 = arith.select %8, %9, %10 : vector<16x16xi1>, vector<16x16xf32>
    %c0_9 = arith.constant 0 : index
    %c0_10 = arith.constant 0 : index
    %12 = vector.load %arg6[%c0_9, %c0_10] : memref<10x32xf32, #tpu.memory_space<vmem>>, vector<1x32xf32>
    %c1 = arith.constant 1 : index
    %c0_11 = arith.constant 0 : index
    %13 = vector.load %arg6[%c1, %c0_11] : memref<10x32xf32, #tpu.memory_space<vmem>>, vector<1x32xf32>
    %c2 = arith.constant 2 : index
    %c0_12 = arith.constant 0 : index
    %14 = vector.load %arg6[%c2, %c0_12] : memref<10x32xf32, #tpu.memory_space<vmem>>, vector<1x32xf32>
    %c3 = arith.constant 3 : index
    %c0_13 = arith.constant 0 : index
    %15 = vector.load %arg6[%c3, %c0_13] : memref<10x32xf32, #tpu.memory_space<vmem>>, vector<1x32xf32>
    %c4 = arith.constant 4 : index
    %c0_14 = arith.constant 0 : index
    %16 = vector.load %arg6[%c4, %c0_14] : memref<10x32xf32, #tpu.memory_space<vmem>>, vector<1x32xf32>
    %c5 = arith.constant 5 : index
    %c0_15 = arith.constant 0 : index
    %17 = vector.load %arg6[%c5, %c0_15] : memref<10x32xf32, #tpu.memory_space<vmem>>, vector<1x32xf32>
    %c6 = arith.constant 6 : index
    %c0_16 = arith.constant 0 : index
    %18 = vector.load %arg6[%c6, %c0_16] : memref<10x32xf32, #tpu.memory_space<vmem>>, vector<1x32xf32>
    %c7 = arith.constant 7 : index
    %c0_17 = arith.constant 0 : index
    %19 = vector.load %arg6[%c7, %c0_17] : memref<10x32xf32, #tpu.memory_space<vmem>>, vector<1x32xf32>
    %c8 = arith.constant 8 : index
    %c0_18 = arith.constant 0 : index
    %20 = vector.load %arg6[%c8, %c0_18] : memref<10x32xf32, #tpu.memory_space<vmem>>, vector<1x32xf32>
    %c9 = arith.constant 9 : index
    %c0_19 = arith.constant 0 : index
    %21 = vector.load %arg6[%c9, %c0_19] : memref<10x32xf32, #tpu.memory_space<vmem>>, vector<1x32xf32>
    %cst_20 = arith.constant dense<0.000000e+00> : vector<16xf32>
    %22 = vector.multi_reduction <add>, %1, %cst_20 [1] : vector<16x32xf32> to vector<16xf32>
    %23 = vector.shape_cast %22 : vector<16xf32> to vector<16x1xf32>
    %cst_21 = arith.constant 3.200000e+01 : f32
    %24 = vector.broadcast %cst_21 : f32 to vector<16x1xf32>
    %25 = arith.divf %23, %24 : vector<16x1xf32>
    %26 = vector.broadcast %25 : vector<16x1xf32> to vector<16x32xf32>
    %27 = arith.subf %1, %26 : vector<16x32xf32>
    %28 = arith.mulf %27, %27 : vector<16x32xf32>
    %cst_22 = arith.constant dense<0.000000e+00> : vector<16xf32>
    %29 = vector.multi_reduction <add>, %28, %cst_22 [1] : vector<16x32xf32> to vector<16xf32>
    %30 = vector.shape_cast %29 : vector<16xf32> to vector<16x1xf32>
    %cst_23 = arith.constant 3.200000e+01 : f32
    %31 = vector.broadcast %cst_23 : f32 to vector<16x1xf32>
    %32 = arith.divf %30, %31 : vector<16x1xf32>
    %33 = vector.broadcast %25 : vector<16x1xf32> to vector<16x32xf32>
    %34 = arith.subf %1, %33 : vector<16x32xf32>
    %cst_24 = arith.constant 9.99999974E-6 : f32
    %35 = vector.broadcast %cst_24 : f32 to vector<16x1xf32>
    %36 = arith.addf %32, %35 : vector<16x1xf32>
    %37 = math.rsqrt %36 : vector<16x1xf32>
    %38 = vector.broadcast %37 : vector<16x1xf32> to vector<16x32xf32>
    %39 = arith.mulf %34, %38 : vector<16x32xf32>
    %40 = vector.broadcast %12 : vector<1x32xf32> to vector<16x32xf32>
    %41 = arith.mulf %39, %40 : vector<16x32xf32>
    %42 = vector.broadcast %13 : vector<1x32xf32> to vector<16x32xf32>
    %43 = arith.addf %41, %42 : vector<16x32xf32>
    %44 = arith.truncf %43 : vector<16x32xf32> to vector<16x32xbf16>
    %c0_25 = arith.constant 0 : index
    %c0_26 = arith.constant 0 : index
    %45 = vector.load %arg4[%c0_25, %c0_26] : memref<32x96xbf16, #tpu.memory_space<vmem>>, vector<32x96xbf16>
    %cst_27 = arith.constant dense<0.000000e+00> : vector<16x96xf32>
    %46 = tpu.matmul %44, %45, %cst_27 {dimension_numbers = #tpu.dot_dimension_numbers<[1], [0], [0], [1], [0, 0, 1, 1], [], []>} : vector<16x32xbf16>, vector<32x96xbf16>, vector<16x96xf32> -> vector<16x96xf32>
    %47 = vector.extract_strided_slice %46 {offsets = [0, 0], sizes = [16, 32], strides = [1, 1]} : vector<16x96xf32> to vector<16x32xf32>
    %48 = vector.broadcast %14 : vector<1x32xf32> to vector<16x32xf32>
    %49 = arith.addf %47, %48 : vector<16x32xf32>
    %50 = arith.truncf %49 : vector<16x32xf32> to vector<16x32xbf16>
    %51 = vector.extract_strided_slice %46 {offsets = [0, 32], sizes = [16, 32], strides = [1, 1]} : vector<16x96xf32> to vector<16x32xf32>
    %52 = vector.broadcast %15 : vector<1x32xf32> to vector<16x32xf32>
    %53 = arith.addf %51, %52 : vector<16x32xf32>
    %54 = arith.truncf %53 : vector<16x32xf32> to vector<16x32xbf16>
    %55 = vector.extract_strided_slice %46 {offsets = [0, 64], sizes = [16, 32], strides = [1, 1]} : vector<16x96xf32> to vector<16x32xf32>
    %56 = vector.broadcast %16 : vector<1x32xf32> to vector<16x32xf32>
    %57 = arith.addf %55, %56 : vector<16x32xf32>
    %58 = arith.truncf %57 : vector<16x32xf32> to vector<16x32xbf16>
    %c0_28 = arith.constant 0 : index
    %c0_29 = arith.constant 0 : index
    %59 = vector.load %arg5[%c0_28, %c0_29] : memref<96x32xbf16, #tpu.memory_space<vmem>>, vector<96x32xbf16>
    %60 = vector.extract_strided_slice %59 {offsets = [0, 0], sizes = [32, 32], strides = [1, 1]} : vector<96x32xbf16> to vector<32x32xbf16>
    %61 = vector.extract_strided_slice %59 {offsets = [32, 0], sizes = [32, 32], strides = [1, 1]} : vector<96x32xbf16> to vector<32x32xbf16>
    %62 = vector.extract_strided_slice %59 {offsets = [64, 0], sizes = [32, 32], strides = [1, 1]} : vector<96x32xbf16> to vector<32x32xbf16>
    %63 = vector.extract_strided_slice %50 {offsets = [0, 0], sizes = [16, 8], strides = [1, 1]} : vector<16x32xbf16> to vector<16x8xbf16>
    %64 = vector.extract_strided_slice %54 {offsets = [0, 0], sizes = [16, 8], strides = [1, 1]} : vector<16x32xbf16> to vector<16x8xbf16>
    %cst_30 = arith.constant dense<0.000000e+00> : vector<16x16xf32>
    %65 = tpu.matmul %63, %64, %cst_30 {dimension_numbers = #tpu.dot_dimension_numbers<[1], [1], [0], [0], [0, 0, 1, 0], [], []>} : vector<16x8xbf16>, vector<16x8xbf16>, vector<16x16xf32> -> vector<16x16xf32>
    %66 = arith.addf %65, %11 : vector<16x16xf32>
    %cst_31 = arith.constant dense<0xFF800000> : vector<16xf32>
    %67 = vector.multi_reduction <maximumf>, %66, %cst_31 [1] : vector<16x16xf32> to vector<16xf32>
    %68 = vector.shape_cast %67 : vector<16xf32> to vector<16x1xf32>
    %69 = vector.broadcast %68 : vector<16x1xf32> to vector<16x16xf32>
    %70 = arith.subf %66, %69 : vector<16x16xf32>
    %71 = math.exp %70 : vector<16x16xf32>
    %cst_32 = arith.constant dense<0.000000e+00> : vector<16xf32>
    %72 = vector.multi_reduction <add>, %71, %cst_32 [1] : vector<16x16xf32> to vector<16xf32>
    %73 = vector.shape_cast %72 : vector<16xf32> to vector<16x1xf32>
    %74 = tpu.reciprocal %73 {approx = true} : vector<16x1xf32> -> vector<16x1xf32>
    %75 = vector.broadcast %74 : vector<16x1xf32> to vector<16x16xf32>
    %76 = arith.mulf %71, %75 : vector<16x16xf32>
    %77 = arith.truncf %76 : vector<16x16xf32> to vector<16x16xbf16>
    %78 = vector.extract_strided_slice %58 {offsets = [0, 0], sizes = [16, 8], strides = [1, 1]} : vector<16x32xbf16> to vector<16x8xbf16>
    %cst_33 = arith.constant dense<0.000000e+00> : vector<16x8xf32>
    %79 = tpu.matmul %77, %78, %cst_33 {dimension_numbers = #tpu.dot_dimension_numbers<[1], [0], [0], [1], [0, 0, 1, 1], [], []>} : vector<16x16xbf16>, vector<16x8xbf16>, vector<16x8xf32> -> vector<16x8xf32>
    %c0_34 = arith.constant 0 : index
    %c0_35 = arith.constant 0 : index
    %80 = vector.load %arg8[%c0_34, %c0_35] : memref<16x32xf32, #tpu.memory_space<vmem>>, vector<16x8xf32>
    tpu.vector_store %arg8[%c0_34, %c0_35], %79 {strides = array<i32>} : memref<16x32xf32, #tpu.memory_space<vmem>>, vector<16x8xf32>,
    %81 = vector.extract_strided_slice %50 {offsets = [0, 8], sizes = [16, 8], strides = [1, 1]} : vector<16x32xbf16> to vector<16x8xbf16>
    %82 = vector.extract_strided_slice %54 {offsets = [0, 8], sizes = [16, 8], strides = [1, 1]} : vector<16x32xbf16> to vector<16x8xbf16>
    %cst_36 = arith.constant dense<0.000000e+00> : vector<16x16xf32>
    %83 = tpu.matmul %81, %82, %cst_36 {dimension_numbers = #tpu.dot_dimension_numbers<[1], [1], [0], [0], [0, 0, 1, 0], [], []>} : vector<16x8xbf16>, vector<16x8xbf16>, vector<16x16xf32> -> vector<16x16xf32>
    %84 = arith.addf %83, %11 : vector<16x16xf32>
    %cst_37 = arith.constant dense<0xFF800000> : vector<16xf32>
    %85 = vector.multi_reduction <maximumf>, %84, %cst_37 [1] : vector<16x16xf32> to vector<16xf32>
    %86 = vector.shape_cast %85 : vector<16xf32> to vector<16x1xf32>
    %87 = vector.broadcast %86 : vector<16x1xf32> to vector<16x16xf32>
    %88 = arith.subf %84, %87 : vector<16x16xf32>
    %89 = math.exp %88 : vector<16x16xf32>
    %cst_38 = arith.constant dense<0.000000e+00> : vector<16xf32>
    %90 = vector.multi_reduction <add>, %89, %cst_38 [1] : vector<16x16xf32> to vector<16xf32>
    %91 = vector.shape_cast %90 : vector<16xf32> to vector<16x1xf32>
    %92 = tpu.reciprocal %91 {approx = true} : vector<16x1xf32> -> vector<16x1xf32>
    %93 = vector.broadcast %92 : vector<16x1xf32> to vector<16x16xf32>
    %94 = arith.mulf %89, %93 : vector<16x16xf32>
    %95 = arith.truncf %94 : vector<16x16xf32> to vector<16x16xbf16>
    %96 = vector.extract_strided_slice %58 {offsets = [0, 8], sizes = [16, 8], strides = [1, 1]} : vector<16x32xbf16> to vector<16x8xbf16>
    %cst_39 = arith.constant dense<0.000000e+00> : vector<16x8xf32>
    %97 = tpu.matmul %95, %96, %cst_39 {dimension_numbers = #tpu.dot_dimension_numbers<[1], [0], [0], [1], [0, 0, 1, 1], [], []>} : vector<16x16xbf16>, vector<16x8xbf16>, vector<16x8xf32> -> vector<16x8xf32>
    %c0_40 = arith.constant 0 : index
    %c8_41 = arith.constant 8 : index
    %98 = vector.load %arg8[%c0_40, %c8_41] : memref<16x32xf32, #tpu.memory_space<vmem>>, vector<16x8xf32>
    tpu.vector_store %arg8[%c0_40, %c8_41], %97 {strides = array<i32>} : memref<16x32xf32, #tpu.memory_space<vmem>>, vector<16x8xf32>,
    %99 = vector.extract_strided_slice %50 {offsets = [0, 16], sizes = [16, 8], strides = [1, 1]} : vector<16x32xbf16> to vector<16x8xbf16>
    %100 = vector.extract_strided_slice %54 {offsets = [0, 16], sizes = [16, 8], strides = [1, 1]} : vector<16x32xbf16> to vector<16x8xbf16>
    %cst_42 = arith.constant dense<0.000000e+00> : vector<16x16xf32>
    %101 = tpu.matmul %99, %100, %cst_42 {dimension_numbers = #tpu.dot_dimension_numbers<[1], [1], [0], [0], [0, 0, 1, 0], [], []>} : vector<16x8xbf16>, vector<16x8xbf16>, vector<16x16xf32> -> vector<16x16xf32>
    %102 = arith.addf %101, %11 : vector<16x16xf32>
    %cst_43 = arith.constant dense<0xFF800000> : vector<16xf32>
    %103 = vector.multi_reduction <maximumf>, %102, %cst_43 [1] : vector<16x16xf32> to vector<16xf32>
    %104 = vector.shape_cast %103 : vector<16xf32> to vector<16x1xf32>
    %105 = vector.broadcast %104 : vector<16x1xf32> to vector<16x16xf32>
    %106 = arith.subf %102, %105 : vector<16x16xf32>
    %107 = math.exp %106 : vector<16x16xf32>
    %cst_44 = arith.constant dense<0.000000e+00> : vector<16xf32>
    %108 = vector.multi_reduction <add>, %107, %cst_44 [1] : vector<16x16xf32> to vector<16xf32>
    %109 = vector.shape_cast %108 : vector<16xf32> to vector<16x1xf32>
    %110 = tpu.reciprocal %109 {approx = true} : vector<16x1xf32> -> vector<16x1xf32>
    %111 = vector.broadcast %110 : vector<16x1xf32> to vector<16x16xf32>
    %112 = arith.mulf %107, %111 : vector<16x16xf32>
    %113 = arith.truncf %112 : vector<16x16xf32> to vector<16x16xbf16>
    %114 = vector.extract_strided_slice %58 {offsets = [0, 16], sizes = [16, 8], strides = [1, 1]} : vector<16x32xbf16> to vector<16x8xbf16>
    %cst_45 = arith.constant dense<0.000000e+00> : vector<16x8xf32>
    %115 = tpu.matmul %113, %114, %cst_45 {dimension_numbers = #tpu.dot_dimension_numbers<[1], [0], [0], [1], [0, 0, 1, 1], [], []>} : vector<16x16xbf16>, vector<16x8xbf16>, vector<16x8xf32> -> vector<16x8xf32>
    %c0_46 = arith.constant 0 : index
    %c16 = arith.constant 16 : index
    %116 = vector.load %arg8[%c0_46, %c16] : memref<16x32xf32, #tpu.memory_space<vmem>>, vector<16x8xf32>
    tpu.vector_store %arg8[%c0_46, %c16], %115 {strides = array<i32>} : memref<16x32xf32, #tpu.memory_space<vmem>>, vector<16x8xf32>,
    %117 = vector.extract_strided_slice %50 {offsets = [0, 24], sizes = [16, 8], strides = [1, 1]} : vector<16x32xbf16> to vector<16x8xbf16>
    %118 = vector.extract_strided_slice %54 {offsets = [0, 24], sizes = [16, 8], strides = [1, 1]} : vector<16x32xbf16> to vector<16x8xbf16>
    %cst_47 = arith.constant dense<0.000000e+00> : vector<16x16xf32>
    %119 = tpu.matmul %117, %118, %cst_47 {dimension_numbers = #tpu.dot_dimension_numbers<[1], [1], [0], [0], [0, 0, 1, 0], [], []>} : vector<16x8xbf16>, vector<16x8xbf16>, vector<16x16xf32> -> vector<16x16xf32>
    %120 = arith.addf %119, %11 : vector<16x16xf32>
    %cst_48 = arith.constant dense<0xFF800000> : vector<16xf32>
    %121 = vector.multi_reduction <maximumf>, %120, %cst_48 [1] : vector<16x16xf32> to vector<16xf32>
    %122 = vector.shape_cast %121 : vector<16xf32> to vector<16x1xf32>
    %123 = vector.broadcast %122 : vector<16x1xf32> to vector<16x16xf32>
    %124 = arith.subf %120, %123 : vector<16x16xf32>
    %125 = math.exp %124 : vector<16x16xf32>
    %cst_49 = arith.constant dense<0.000000e+00> : vector<16xf32>
    %126 = vector.multi_reduction <add>, %125, %cst_49 [1] : vector<16x16xf32> to vector<16xf32>
    %127 = vector.shape_cast %126 : vector<16xf32> to vector<16x1xf32>
    %128 = tpu.reciprocal %127 {approx = true} : vector<16x1xf32> -> vector<16x1xf32>
    %129 = vector.broadcast %128 : vector<16x1xf32> to vector<16x16xf32>
    %130 = arith.mulf %125, %129 : vector<16x16xf32>
    %131 = arith.truncf %130 : vector<16x16xf32> to vector<16x16xbf16>
    %132 = vector.extract_strided_slice %58 {offsets = [0, 24], sizes = [16, 8], strides = [1, 1]} : vector<16x32xbf16> to vector<16x8xbf16>
    %cst_50 = arith.constant dense<0.000000e+00> : vector<16x8xf32>
    %133 = tpu.matmul %131, %132, %cst_50 {dimension_numbers = #tpu.dot_dimension_numbers<[1], [0], [0], [1], [0, 0, 1, 1], [], []>} : vector<16x16xbf16>, vector<16x8xbf16>, vector<16x8xf32> -> vector<16x8xf32>
    %c0_51 = arith.constant 0 : index
    %c24 = arith.constant 24 : index
    %134 = vector.load %arg8[%c0_51, %c24] : memref<16x32xf32, #tpu.memory_space<vmem>>, vector<16x8xf32>
    tpu.vector_store %arg8[%c0_51, %c24], %133 {strides = array<i32>} : memref<16x32xf32, #tpu.memory_space<vmem>>, vector<16x8xf32>,
    %c0_52 = arith.constant 0 : index
    %c0_53 = arith.constant 0 : index
    %135 = vector.load %arg8[%c0_52, %c0_53] : memref<16x32xf32, #tpu.memory_space<vmem>>, vector<16x32xf32>
    %136 = arith.truncf %135 : vector<16x32xf32> to vector<16x32xbf16>
    %cst_54 = arith.constant dense<0.000000e+00> : vector<16x32xf32>
    %137 = tpu.matmul %136, %60, %cst_54 {dimension_numbers = #tpu.dot_dimension_numbers<[1], [0], [0], [1], [0, 0, 1, 1], [], []>} : vector<16x32xbf16>, vector<32x32xbf16>, vector<16x32xf32> -> vector<16x32xf32>
    %138 = vector.broadcast %17 : vector<1x32xf32> to vector<16x32xf32>
    %139 = arith.addf %137, %138 : vector<16x32xf32>
    %140 = arith.addf %139, %1 : vector<16x32xf32>
    %cst_55 = arith.constant dense<0.000000e+00> : vector<16xf32>
    %141 = vector.multi_reduction <add>, %140, %cst_55 [1] : vector<16x32xf32> to vector<16xf32>
    %142 = vector.shape_cast %141 : vector<16xf32> to vector<16x1xf32>
    %cst_56 = arith.constant 3.200000e+01 : f32
    %143 = vector.broadcast %cst_56 : f32 to vector<16x1xf32>
    %144 = arith.divf %142, %143 : vector<16x1xf32>
    %145 = vector.broadcast %144 : vector<16x1xf32> to vector<16x32xf32>
    %146 = arith.subf %140, %145 : vector<16x32xf32>
    %147 = arith.mulf %146, %146 : vector<16x32xf32>
    %cst_57 = arith.constant dense<0.000000e+00> : vector<16xf32>
    %148 = vector.multi_reduction <add>, %147, %cst_57 [1] : vector<16x32xf32> to vector<16xf32>
    %149 = vector.shape_cast %148 : vector<16xf32> to vector<16x1xf32>
    %cst_58 = arith.constant 3.200000e+01 : f32
    %150 = vector.broadcast %cst_58 : f32 to vector<16x1xf32>
    %151 = arith.divf %149, %150 : vector<16x1xf32>
    %152 = vector.broadcast %144 : vector<16x1xf32> to vector<16x32xf32>
    %153 = arith.subf %140, %152 : vector<16x32xf32>
    %cst_59 = arith.constant 9.99999974E-6 : f32
    %154 = vector.broadcast %cst_59 : f32 to vector<16x1xf32>
    %155 = arith.addf %151, %154 : vector<16x1xf32>
    %156 = math.rsqrt %155 : vector<16x1xf32>
    %157 = vector.broadcast %156 : vector<16x1xf32> to vector<16x32xf32>
    %158 = arith.mulf %153, %157 : vector<16x32xf32>
    %159 = vector.broadcast %18 : vector<1x32xf32> to vector<16x32xf32>
    %160 = arith.mulf %158, %159 : vector<16x32xf32>
    %161 = vector.broadcast %19 : vector<1x32xf32> to vector<16x32xf32>
    %162 = arith.addf %160, %161 : vector<16x32xf32>
    %163 = arith.truncf %162 : vector<16x32xf32> to vector<16x32xbf16>
    %cst_60 = arith.constant dense<0.000000e+00> : vector<16x32xf32>
    %164 = tpu.matmul %163, %61, %cst_60 {dimension_numbers = #tpu.dot_dimension_numbers<[1], [0], [0], [1], [0, 0, 1, 1], [], []>} : vector<16x32xbf16>, vector<32x32xbf16>, vector<16x32xf32> -> vector<16x32xf32>
    %165 = vector.broadcast %20 : vector<1x32xf32> to vector<16x32xf32>
    %166 = arith.addf %164, %165 : vector<16x32xf32>
    %167 = arith.negf %166 : vector<16x32xf32>
    %168 = math.exp %167 : vector<16x32xf32>
    %cst_61 = arith.constant 1.000000e+00 : f32
    %169 = vector.broadcast %cst_61 : f32 to vector<16x32xf32>
    %170 = arith.addf %169, %168 : vector<16x32xf32>
    %171 = arith.divf %169, %170 : vector<16x32xf32>
    %172 = arith.mulf %166, %171 : vector<16x32xf32>
    %173 = arith.truncf %172 : vector<16x32xf32> to vector<16x32xbf16>
    %cst_62 = arith.constant dense<0.000000e+00> : vector<16x32xf32>
    %174 = tpu.matmul %173, %62, %cst_62 {dimension_numbers = #tpu.dot_dimension_numbers<[1], [0], [0], [1], [0, 0, 1, 1], [], []>} : vector<16x32xbf16>, vector<32x32xbf16>, vector<16x32xf32> -> vector<16x32xf32>
    %175 = vector.broadcast %21 : vector<1x32xf32> to vector<16x32xf32>
    %176 = arith.addf %174, %175 : vector<16x32xf32>
    %177 = arith.addf %176, %140 : vector<16x32xf32>
    %c0_63 = arith.constant 0 : index
    %c0_64 = arith.constant 0 : index
    %c0_65 = arith.constant 0 : index
    %178 = vector.load %arg7[%c0_63, %c0_64, %c0_65] : memref<1x16x32xf32, #tpu.memory_space<vmem>>, vector<1x16x32xf32>
    %179 = vector.shape_cast %178 : vector<1x16x32xf32> to vector<16x32xf32>
    %180 = vector.shape_cast %177 : vector<16x32xf32> to vector<1x16x32xf32>
    tpu.vector_store %arg7[%c0_63, %c0_64, %c0_65], %180 {strides = array<i32>} : memref<1x16x32xf32, #tpu.memory_space<vmem>>, vector<1x16x32xf32>,
    return
  }
  func.func @transform_0(%arg0: i32) -> (i32, i32, i32) {
    %c0_i32 = arith.constant 0 : i32
    %c0_i32_0 = arith.constant 0 : i32
    %c0_i32_1 = arith.constant 0 : i32
    return %arg0, %c0_i32, %c0_i32_0 : i32, i32, i32
  }
  func.func @transform_1(%arg0: i32) -> (i32, i32, i32) {
    %c0_i32 = arith.constant 0 : i32
    %c0_i32_0 = arith.constant 0 : i32
    %c0_i32_1 = arith.constant 0 : i32
    return %arg0, %c0_i32, %c0_i32_0 : i32, i32, i32
  }
  func.func @transform_2(%arg0: i32) -> (i32, i32, i32) {
    %c0_i32 = arith.constant 0 : i32
    %c0_i32_0 = arith.constant 0 : i32
    %c0_i32_1 = arith.constant 0 : i32
    return %arg0, %c0_i32, %c0_i32_0 : i32, i32, i32
  }
  func.func @transform_3(%arg0: i32) -> (i32, i32) {
    %c0_i32 = arith.constant 0 : i32
    %c0_i32_0 = arith.constant 0 : i32
    %c0_i32_1 = arith.constant 0 : i32
    return %c0_i32, %c0_i32_0 : i32, i32
  }
  func.func @transform_4(%arg0: i32) -> (i32, i32) {
    %c0_i32 = arith.constant 0 : i32
    %c0_i32_0 = arith.constant 0 : i32
    %c0_i32_1 = arith.constant 0 : i32
    return %c0_i32, %c0_i32_0 : i32, i32
  }
  func.func @transform_5(%arg0: i32) -> (i32, i32) {
    %c0_i32 = arith.constant 0 : i32
    %c0_i32_0 = arith.constant 0 : i32
    %c0_i32_1 = arith.constant 0 : i32
    return %c0_i32, %c0_i32_0 : i32, i32
  }
  func.func @transform_6(%arg0: i32) -> (i32, i32, i32) {
    %c0_i32 = arith.constant 0 : i32
    %c0_i32_0 = arith.constant 0 : i32
    %c0_i32_1 = arith.constant 0 : i32
    return %arg0, %c0_i32, %c0_i32_0 : i32, i32, i32
  }
}

</mosaic_0001>

<llo_original>
// kernel: tpu_custom_call.1
$region0: #{tpu_custom_call.1}
  #allocation0 [shape = 'u32[]', space=smem, size = 0x4, offset = 0x4, fixed_abs, tag = 'smem constant byte address 0x4 - core index']
  #allocation1 [shape = 'u32[144,128]{1,0:T(1,128)}', space=vmem, size = 0x12000, scoped, tag = 'internal scratch']
  #allocation2 [shape = 'f32[16,32]{1,0:T(8,128)}', space=vmem, size = 0x2000, scoped, tag = 'scratch operand']
  %s0 = inlined_call_operand.vmem [shape: s32[4,16,1], index: 0, kind: input, shape index: {}]
  %s1 = inlined_call_operand.vmem [shape: s32[4,1,16], index: 1, kind: input, shape index: {}]
  %s2 = inlined_call_operand.vmem [shape: f32[4,16,32], index: 2, kind: input, shape index: {}]
  %s3 = inlined_call_operand.vmem [shape: bf16[32,96], index: 3, kind: input, shape index: {}]
  %s4 = inlined_call_operand.vmem [shape: bf16[96,32], index: 4, kind: input, shape index: {}]
  %s5 = inlined_call_operand.vmem [shape: f32[10,32], index: 5, kind: input, shape index: {}]
  %s6 = inlined_call_operand.hbm [shape: f32[4,16,32], index: 6, kind: output, shape index: {}]
  %s7 = sld [smem:[#allocation0]]
  $region57: #{tpu_custom_call.1} parent=0
    _
  %s9 = ssub.s32 1, %s7
  %s10 = scalar_select 0, %s9, %s7
  $region1: #{tpu_custom_call.1} parent=0
    #allocation3 [shape = 'u8[16384]{0}', space=vmem, size = 0x4000, scoped, tag = 'output window, operand 0']
    #allocation4 [shape = 's32[2]{0}', space=sflag, size = 0x8, scoped, tag = 'scoped memory for tpu_custom_call.1']
    %11 = vsyncpa [#allocation4], 0
    %s12 = scalar_lea.sflag [#allocation4], 1
    %13 = vsyncpa %s12, 0
    loop: start=0, step=1, limit=6
    $region2: #{tpu_custom_call.1} parent=1 // loop_pre_header
      _
    $region3: #{tpu_custom_call.1} parent=1 // loop_header
      %s15 = sphi 0, %s19
      %p16 = scmp.ge.s32.totalorder %s15, 6
      %s25 = sphi 0, %s27
      %s28 = sphi 0, %s25
      %s29 = sphi 0, %s28
      %s45 = sphi 0, %s29
      %s51 = sphi 0, %s53
      %s54 = sphi 0, %s51
      %s55 = sphi 0, %s54
      %s71 = sphi 0, %s55
      %s77 = sphi 0, %s79
      %s80 = sphi 0, %s77
      %s81 = sphi 0, %s80
      %s97 = sphi 0, %s81
      %s101 = sphi 0, %s101
      %s103 = sphi 0, %s101
      %s104 = sphi 0, %s103
      %s118 = sphi 0, %s104
      %s122 = sphi 0, %s122
      %s124 = sphi 0, %s122
      %s125 = sphi 0, %s124
      %s139 = sphi 0, %s125
      %s143 = sphi 0, %s143
      %s145 = sphi 0, %s143
      %s146 = sphi 0, %s145
      %s160 = sphi 0, %s146
      %s166 = sphi 0, %s168
      %s169 = sphi 0, %s166
      %s170 = sphi 0, %s169
      %s186 = sphi 0, %s170
    $region4: #{tpu_custom_call.1} parent=1 // loop_header_branch
      %18 = sbr.rel (%p16) target = $region8
    $region5: #{tpu_custom_call.1} parent=1 // loop_body
      %s20 = ssub.s32 %s15, 1
      %s21 = ssub.s32 %s15, 2
      %s22 = sadd.s32 %s15, 1
      %s23 = ssub.s32 %s15, %s22
      %p24 = scmp.eq.s32.totalorder %s23, 0
      %s26 = sadd.s32 %s25, 1
      %s27 = scalar_select %p24, %s25, %s26
      %p30 = pneg %p24
      %p31 = scmp.eq.s32.totalorder %s15, 3
      %p32 = por %p30, %p31
      %p33 = scmp.ne.s32.totalorder %s25, %s28
      %p34 = scmp.eq.s32.totalorder %s15, 0
      %p35 = por %p33, %p34
      %p36 = scmp.ne.s32.totalorder %s25, %s28
      %p37 = scmp.eq.s32.totalorder %s20, 3
      %p38 = por %p36, %p37
      %p39 = scmp.ne.s32.totalorder %s28, %s29
      %p40 = scmp.eq.s32.totalorder %s20, 0
      %p41 = por %p39, %p40
      %p42 = scmp.ne.s32.totalorder %s28, %s29
      %p43 = scmp.eq.s32.totalorder %s21, 3
      %p44 = por %p42, %p43
      %p46 = scmp.ne.s32.totalorder %s29, %s45
      %p47 = scmp.eq.s32.totalorder %s21, 0
      %p48 = por %p46, %p47
      %s49 = ssub.s32 %s15, %s22
      %p50 = scmp.eq.s32.totalorder %s49, 0
      %s52 = sadd.s32 %s51, 1
      %s53 = scalar_select %p50, %s51, %s52
      %p56 = pneg %p50
      %p57 = scmp.eq.s32.totalorder %s15, 3
      %p58 = por %p56, %p57
      %p59 = scmp.ne.s32.totalorder %s51, %s54
      %p60 = scmp.eq.s32.totalorder %s15, 0
      %p61 = por %p59, %p60
      %p62 = scmp.ne.s32.totalorder %s51, %s54
      %p63 = scmp.eq.s32.totalorder %s20, 3
      %p64 = por %p62, %p63
      %p65 = scmp.ne.s32.totalorder %s54, %s55
      %p66 = scmp.eq.s32.totalorder %s20, 0
      %p67 = por %p65, %p66
      %p68 = scmp.ne.s32.totalorder %s54, %s55
      %p69 = scmp.eq.s32.totalorder %s21, 3
      %p70 = por %p68, %p69
      %p72 = scmp.ne.s32.totalorder %s55, %s71
      %p73 = scmp.eq.s32.totalorder %s21, 0
      %p74 = por %p72, %p73
      %s75 = ssub.s32 %s15, %s22
      %p76 = scmp.eq.s32.totalorder %s75, 0
      %s78 = sadd.s32 %s77, 1
      %s79 = scalar_select %p76, %s77, %s78
      %p82 = pneg %p76
      %p83 = scmp.eq.s32.totalorder %s15, 3
      %p84 = por %p82, %p83
      %p85 = scmp.ne.s32.totalorder %s77, %s80
      %p86 = scmp.eq.s32.totalorder %s15, 0
      %p87 = por %p85, %p86
      %p88 = scmp.ne.s32.totalorder %s77, %s80
      %p89 = scmp.eq.s32.totalorder %s20, 3
      %p90 = por %p88, %p89
      %p91 = scmp.ne.s32.totalorder %s80, %s81
      %p92 = scmp.eq.s32.totalorder %s20, 0
      %p93 = por %p91, %p92
      %p94 = scmp.ne.s32.totalorder %s80, %s81
      %p95 = scmp.eq.s32.totalorder %s21, 3
      %p96 = por %p94, %p95
      %p98 = scmp.ne.s32.totalorder %s81, %s97
      %p99 = scmp.eq.s32.totalorder %s21, 0
      %p100 = por %p98, %p99
      %s102 = sadd.s32 %s101, 1
      %p105 = scmp.eq.s32.totalorder %s15, 3
      %p106 = scmp.ne.s32.totalorder %s101, %s103
      %p107 = scmp.eq.s32.totalorder %s15, 0
      %p108 = por %p106, %p107
      %p109 = scmp.ne.s32.totalorder %s101, %s103
      %p110 = scmp.eq.s32.totalorder %s20, 3
      %p111 = por %p109, %p110
      %p112 = scmp.ne.s32.totalorder %s103, %s104
      %p113 = scmp.eq.s32.totalorder %s20, 0
      %p114 = por %p112, %p113
      %p115 = scmp.ne.s32.totalorder %s103, %s104
      %p116 = scmp.eq.s32.totalorder %s21, 3
      %p117 = por %p115, %p116
      %p119 = scmp.ne.s32.totalorder %s104, %s118
      %p120 = scmp.eq.s32.totalorder %s21, 0
      %p121 = por %p119, %p120
      %s123 = sadd.s32 %s122, 1
      %p126 = scmp.eq.s32.totalorder %s15, 3
      %p127 = scmp.ne.s32.totalorder %s122, %s124
      %p128 = scmp.eq.s32.totalorder %s15, 0
      %p129 = por %p127, %p128
      %p130 = scmp.ne.s32.totalorder %s122, %s124
      %p131 = scmp.eq.s32.totalorder %s20, 3
      %p132 = por %p130, %p131
      %p133 = scmp.ne.s32.totalorder %s124, %s125
      %p134 = scmp.eq.s32.totalorder %s20, 0
      %p135 = por %p133, %p134
      %p136 = scmp.ne.s32.totalorder %s124, %s125
      %p137 = scmp.eq.s32.totalorder %s21, 3
      %p138 = por %p136, %p137
      %p140 = scmp.ne.s32.totalorder %s125, %s139
      %p141 = scmp.eq.s32.totalorder %s21, 0
      %p142 = por %p140, %p141
      %s144 = sadd.s32 %s143, 1
      %p147 = scmp.eq.s32.totalorder %s15, 3
      %p148 = scmp.ne.s32.totalorder %s143, %s145
      %p149 = scmp.eq.s32.totalorder %s15, 0
      %p150 = por %p148, %p149
      %p151 = scmp.ne.s32.totalorder %s143, %s145
      %p152 = scmp.eq.s32.totalorder %s20, 3
      %p153 = por %p151, %p152
      %p154 = scmp.ne.s32.totalorder %s145, %s146
      %p155 = scmp.eq.s32.totalorder %s20, 0
      %p156 = por %p154, %p155
      %p157 = scmp.ne.s32.totalorder %s145, %s146
      %p158 = scmp.eq.s32.totalorder %s21, 3
      %p159 = por %p157, %p158
      %p161 = scmp.ne.s32.totalorder %s146, %s160
      %p162 = scmp.eq.s32.totalorder %s21, 0
      %p163 = por %p161, %p162
      %s164 = ssub.s32 %s15, %s22
      %p165 = scmp.eq.s32.totalorder %s164, 0
      %s167 = sadd.s32 %s166, 1
      %s168 = scalar_select %p165, %s166, %s167
      %p171 = pneg %p165
      %p172 = scmp.eq.s32.totalorder %s15, 3
      %p173 = por %p171, %p172
      %p174 = scmp.ne.s32.totalorder %s166, %s169
      %p175 = scmp.eq.s32.totalorder %s15, 0
      %p176 = por %p174, %p175
      %p177 = scmp.ne.s32.totalorder %s166, %s169
      %p178 = scmp.eq.s32.totalorder %s20, 3
      %p179 = por %p177, %p178
      %p180 = scmp.ne.s32.totalorder %s169, %s170
      %p181 = scmp.eq.s32.totalorder %s20, 0
      %p182 = por %p180, %p181
      %p183 = scmp.ne.s32.totalorder %s169, %s170
      %p184 = scmp.eq.s32.totalorder %s21, 3
      %p185 = por %p183, %p184
      %p187 = scmp.ne.s32.totalorder %s170, %s186
      %p188 = scmp.eq.s32.totalorder %s21, 0
      %p189 = por %p187, %p188
      %p190 = scmp.le.s32.totalorder 1, %s15
      %p191 = scmp.lt.s32.totalorder %s15, 5
      %p192 = pnand %p190, %p191
      %p193 = pneg %p192
      // Predicated region
      $region9: #{tpu_custom_call.1} parent=5 // pred_check
        _
      $region10: #{tpu_custom_call.1} parent=5 // pred_check_branch
        %195 = sbr.rel (%p192) target = $region12
      $region11: #{tpu_custom_call.1} parent=5 // pred_region
        %s196 = ssub.s32 %s15, 1
        // Predicated region
        $region13: #{tpu_custom_call.1} parent=11 // pred_check
          %p197 = pneg %p114
        $region14: #{tpu_custom_call.1} parent=11 // pred_check_branch
          %199 = sbr.rel (%p197) target = $region16
        $region15: #{tpu_custom_call.1} parent=11 // pred_region
          _
        $region16: #{tpu_custom_call.1} parent=11 // pred_fallthru
          _
        // Predicated region
        $region17: #{tpu_custom_call.1} parent=11 // pred_check
          %p200 = pneg %p135
        $region18: #{tpu_custom_call.1} parent=11 // pred_check_branch
          %202 = sbr.rel (%p200) target = $region20
        $region19: #{tpu_custom_call.1} parent=11 // pred_region
          _
        $region20: #{tpu_custom_call.1} parent=11 // pred_fallthru
          _
        // Predicated region
        $region21: #{tpu_custom_call.1} parent=11 // pred_check
          %p203 = pneg %p156
        $region22: #{tpu_custom_call.1} parent=11 // pred_check_branch
          %205 = sbr.rel (%p203) target = $region24
        $region23: #{tpu_custom_call.1} parent=11 // pred_region
          _
        $region24: #{tpu_custom_call.1} parent=11 // pred_fallthru
          _
      $region12: #{tpu_custom_call.1} parent=5 // pred_fallthru
        _
      %p206 = scmp.lt.s32.totalorder %s15, 4
      // Predicated region
      $region25: #{tpu_custom_call.1} parent=5 // pred_check
        %p207 = pneg %p206
      $region26: #{tpu_custom_call.1} parent=5 // pred_check_branch
        %209 = sbr.rel (%p207) target = $region28
      $region27: #{tpu_custom_call.1} parent=5 // pred_region
        // Predicated region
        $region29: #{tpu_custom_call.1} parent=27 // pred_check
          %p210 = pneg %p35
        $region30: #{tpu_custom_call.1} parent=27 // pred_check_branch
          %212 = sbr.rel (%p210) target = $region32
        $region31: #{tpu_custom_call.1} parent=27 // pred_region
          %p213 = scmp.lt.s32.totalorder %s15, 3
          %s214 = scalar_select %p213, %s15, 3
          %s215 = smul.addr %s214, 2
          %s216 = smul.addr %s215, 8
          %s217 = scalar_lea.vmem %s0, %s216
        $region32: #{tpu_custom_call.1} parent=27 // pred_fallthru
          _
        // Predicated region
        $region33: #{tpu_custom_call.1} parent=27 // pred_check
          %p218 = pneg %p61
        $region34: #{tpu_custom_call.1} parent=27 // pred_check_branch
          %220 = sbr.rel (%p218) target = $region36
        $region35: #{tpu_custom_call.1} parent=27 // pred_region
          %p221 = scmp.lt.s32.totalorder %s15, 3
          %s222 = scalar_select %p221, %s15, 3
          %s223 = scalar_lea.vmem %s1, %s222
        $region36: #{tpu_custom_call.1} parent=27 // pred_fallthru
          _
        // Predicated region
        $region37: #{tpu_custom_call.1} parent=27 // pred_check
          %p224 = pneg %p87
        $region38: #{tpu_custom_call.1} parent=27 // pred_check_branch
          %226 = sbr.rel (%p224) target = $region40
        $region39: #{tpu_custom_call.1} parent=27 // pred_region
          %p227 = scmp.lt.s32.totalorder %s15, 3
          %s228 = scalar_select %p227, %s15, 3
          %s229 = smul.addr %s228, 2
          %s230 = smul.addr %s229, 8
          %s231 = scalar_lea.vmem %s2, %s230
        $region40: #{tpu_custom_call.1} parent=27 // pred_fallthru
          _
      $region28: #{tpu_custom_call.1} parent=5 // pred_fallthru
        _
      %p232 = scmp.le.s32.totalorder 1, %s15
      %p233 = scmp.lt.s32.totalorder %s15, 5
      %p234 = pnand %p232, %p233
      %p235 = pneg %p234
      // Predicated region
      $region41: #{tpu_custom_call.1} parent=5 // pred_check
        _
      $region42: #{tpu_custom_call.1} parent=5 // pred_check_branch
        %237 = sbr.rel (%p234) target = $region44
      $region43: #{tpu_custom_call.1} parent=5 // pred_region
        %s238 = ssub.s32 %s15, 1
        %p239 = scmp.lt.s32.totalorder %s20, 3
        %s240 = scalar_select %p239, %s20, 3
        %s241 = smul.addr %s240, 2
        %s242 = smul.addr %s241, 8
        %s243 = scalar_lea.vmem %s0, %s242
        %p244 = pneg %p41
        %p245 = pneg %p38
        %p246 = scmp.lt.s32.totalorder %s20, 3
        %s247 = scalar_select %p246, %s20, 3
        %s248 = scalar_lea.vmem %s1, %s247
        %p249 = pneg %p67
        %p250 = pneg %p64
        %p251 = scmp.lt.s32.totalorder %s20, 3
        %s252 = scalar_select %p251, %s20, 3
        %s253 = smul.addr %s252, 2
        %s254 = smul.addr %s253, 8
        %s255 = scalar_lea.vmem %s2, %s254
        %p256 = pneg %p93
        %p257 = pneg %p90
        %p258 = pneg %p114
        %p259 = pneg %p111
        %p260 = pneg %p135
        %p261 = pneg %p132
        %p262 = pneg %p156
        %p263 = pneg %p153
        %p264 = pneg %p182
        %p265 = pneg %p179
        %s266 = sand.u32 %s169, 1
        %s267 = scalar_lea.sflag [#allocation4], %s266
        %s268 = sand.u32 %s169, 1
        %s269 = smul.addr %s268, 16
        %s270 = scalar_lea.vmem [#allocation3], %s269
        %p271 = scmp.lt.s32.totalorder %s20, 3
        %s272 = scalar_select %p271, %s20, 3
        %s273 = smul.addr %s272, 2
        %s274 = smul.addr %s273, 8
        %s275 = scalar_lea.vmem %s0, %s274
        %p276 = scmp.lt.s32.totalorder %s20, 3
        %s277 = scalar_select %p276, %s20, 3
        %s278 = scalar_lea.vmem %s1, %s277
        %p279 = scmp.lt.s32.totalorder %s20, 3
        %s280 = scalar_select %p279, %s20, 3
        %s281 = smul.addr %s280, 2
        %s282 = smul.addr %s281, 8
        %s283 = scalar_lea.vmem %s2, %s282
        %v285 = vld [vmem:[%s283] sm:$0xff]
        %v286 = vld [vmem:[%s283 + $0x8] sm:$0xff]
        %v287 = vld [vmem:[%s275] sm:$0xff]
        %v288 = vld [vmem:[%s275 + $0x8] sm:$0xff]
        %v289 = vld [vmem:[%s278] sm:$0x1]
        %290 = vset.pattern.permute.xlu0 0
        %291 = vperm.xlu0 %290, %v287
        %v292 = vpop.permute.xlu0 %291
        %293 = vset.pattern.permute.xlu0 0
        %294 = vperm.xlu0 %293, %v288
        %v295 = vpop.permute.xlu0 %294
        %v296 = vlaneseq
        %v297 = vshrl.u32 %v296, 7
        %v298 = vsub.s32 0, %v297
        %v299 = vrot.slane %v289, %v298
        %vm300 = vcmp.ne.s32.totalorder %v292, %v299
        %vm301 = vcmp.ne.s32.totalorder %v295, %v299
        %v302 = vsel %vm300, -1e+09, 0.0
        %v303 = vsel %vm301, -1e+09, 0.0
        %v304 = vld [vmem:[%s5] sm:$0x1]
        %v305 = vld [vmem:[%s5 + $0x1] sm:$0x1]
        %v306 = vld [vmem:[%s5 + $0x2] sm:$0x1]
        %v307 = vld [vmem:[%s5 + $0x3] sm:$0x1]
        %v308 = vld [vmem:[%s5 + $0x4] sm:$0x1]
        %v309 = vld [vmem:[%s5 + $0x5] sm:$0x1]
        %v310 = vld [vmem:[%s5 + $0x6] sm:$0x1]
        %v311 = vld [vmem:[%s5 + $0x7] sm:$0x1]
        %v312 = vld [vmem:[%s5 + $0x8] sm:$0x1]
        %v313 = vld [vmem:[%s5 + $0x9] sm:$0x1]
        %vm314 = vcmask 261120
        %v315 = vsel %vm314, %v285, 0.0
        %316 = vadd.xlane.f32.xlu0 %v315
        %v317 = vpop.xlane.xlu0 %316
        %v318 = vsel %vm314, %v286, 0.0
        %319 = vadd.xlane.f32.xlu0 %v318
        %v320 = vpop.xlane.xlu0 %319
        %v321 = vrcp.pop 32.0
        %v322 = vmul.f32 %v317, %v321
        %v323 = vmul.f32 %v320, %v321
        %v324 = vsub.f32 %v285, %v322
        %v325 = vsub.f32 %v286, %v323
        %v326 = vmul.f32 %v324, %v324
        %v327 = vmul.f32 %v325, %v325
        %v328 = vsel %vm314, %v326, 0.0
        %329 = vadd.xlane.f32.xlu0 %v328
        %v330 = vpop.xlane.xlu0 %329
        %v331 = vsel %vm314, %v327, 0.0
        %332 = vadd.xlane.f32.xlu0 %v331
        %v333 = vpop.xlane.xlu0 %332
        %v334 = vmul.f32 %v330, %v321
        %v335 = vmul.f32 %v333, %v321
        %v336 = vadd.f32 %v334, 1e-05
        %v337 = vadd.f32 %v335, 1e-05
        %v338 = vrsqrt.pop %v336
        %v339 = vrsqrt.pop %v337
        %v340 = vmul.f32 %v324, %v338
        %v341 = vmul.f32 %v325, %v339
        %v342 = vlaneseq
        %v343 = vshrl.u32 %v342, 7
        %v344 = vsub.s32 0, %v343
        %v345 = vrot.slane %v304, %v344
        %v346 = vmul.f32 %v340, %v345
        %v347 = vmul.f32 %v341, %v345
        %v348 = vlaneseq
        %v349 = vshrl.u32 %v348, 7
        %v350 = vsub.s32 0, %v349
        %v351 = vrot.slane %v305, %v350
        %v352 = vadd.f32 %v346, %v351
        %v353 = vadd.f32 %v347, %v351
        %v354 = vpack.c.bf16 %v353, %v352
        %v355 = vld [vmem:[%s3] sm:$0xf]
        %v356 = vld [vmem:[%s3 + $0x4] sm:$0xf]
        %v357 = vld [vmem:[%s3 + $0x8] sm:$0xf]
        %v358 = vld [vmem:[%s3 + $0xc] sm:$0xf]
        %v363 = vunpack.c.l.b16 %v355
        %v364 = vunpack.c.l.b16 %v356
        %v365 = vunpack.c.l.b16 %v357
        %v366 = vunpack.c.l.b16 %v358
        %v367 = vpack.c.b16 %v364, %v363
        %v368 = vpack.c.b16 %v366, %v365
        %v372 = vsel %vm314, %v354, 0
        %374 = vmatprep.subr.bf16.mxu0 0
        %375 = vmatpush1.bf16.msra.mxu0 %v367
        %376 = vmatprep.subr.bf16.mxu0 0
        %377 = vmatpush1.bf16.msra.mxu0 %v368
        %378 = vmatprep.subr.bf16.mxu0 0
        %379 = vmatpush1.bf16.msra.mxu0 0
        %380 = vmatprep.subr.bf16.mxu0 0
        %381 = vmatpush1.bf16.msra.mxu0 0
        %382 = vmatprep.subr.bf16.mxu0 0
        %383 = vmatpush1.bf16.msra.mxu0 0
        %384 = vmatprep.subr.bf16.mxu0 0
        %385 = vmatpush1.bf16.msra.mxu0 0
        %386 = vmatprep.subr.bf16.mxu0 0
        %387 = vmatpush1.bf16.msra.mxu0 0
        %388 = vmatprep.subr.bf16.mxu0 0
        %389 = vmatpush1.bf16.msra.mxu0 0
        %390 = vmatprep.subr.bf16.mxu0 0
        %391 = vmatpush1.bf16.msra.mxu0 0
        %392 = vmatprep.subr.bf16.mxu0 0
        %393 = vmatpush1.bf16.msra.mxu0 0
        %394 = vmatprep.subr.bf16.mxu0 0
        %395 = vmatpush1.bf16.msra.mxu0 0
        %396 = vmatprep.subr.bf16.mxu0 0
        %397 = vmatpush1.bf16.msra.mxu0 0
        %398 = vmatprep.subr.bf16.mxu0 0
        %399 = vmatpush1.bf16.msra.mxu0 0
        %400 = vmatprep.subr.bf16.mxu0 0
        %401 = vmatpush1.bf16.msra.mxu0 0
        %402 = vmatprep.subr.bf16.mxu0 0
        %403 = vmatpush1.bf16.msra.mxu0 0
        %404 = vmatprep.subr.bf16.mxu0 0
        %405 = vmatpush1.bf16.msra.mxu0 0
        %406 = vmatprep.mubr.bf16.mxu0 0
        %407 = vmatmul.mubr.bf16.gmra.mrb[0].mxu0 %v372
        %v408 = vpop.f32.mrb[0].mxu0
        %v409 = vadd.f32 0.0, %v408
        %v410 = vpop.f32.mrb[0].mxu0
        %v411 = vpop.f32.mrb[0].mxu0
        %v412 = vadd.f32 0.0, %v411
        %v413 = vpop.f32.mrb[0].mxu0
        %414 = vdwg.mxu0
        %v415 = vlaneseq
        %v416 = vshrl.u32 %v415, 7
        %v417 = vsub.s32 0, %v416
        %v418 = vrot.slane %v306, %v417
        %v419 = vadd.f32 %v409, %v418
        %v420 = vadd.f32 %v412, %v418
        %v421 = vpack.c.bf16 %v420, %v419
        %v422 = vlaneseq
        %v423 = vshrl.u32 %v422, 7
        %v424 = vsub.s32 0, %v423
        %v425 = vrot.slane %v307, %v424
        %427 = vrot.lane.b32.xlu0 %v425, 32
        %v428 = vpop.permute.xlu0 %427
        %v430 = vadd.f32 %v409, %v428
        %v431 = vadd.f32 %v412, %v428
        %v432 = vpack.c.bf16 %v431, %v430
        %v433 = vlaneseq
        %v434 = vshrl.u32 %v433, 7
        %v435 = vsub.s32 0, %v434
        %v436 = vrot.slane %v308, %v435
        %438 = vrot.lane.b32.xlu0 %v436, 64
        %v439 = vpop.permute.xlu0 %438
        %v441 = vadd.f32 %v409, %v439
        %v442 = vadd.f32 %v412, %v439
        %v443 = vpack.c.bf16 %v442, %v441
        %v444 = vld [vmem:[%s4] sm:$0xf]
        %v445 = vld [vmem:[%s4 + $0x4] sm:$0xf]
        %v446 = vld [vmem:[%s4 + $0x8] sm:$0xf]
        %v447 = vld [vmem:[%s4 + $0xc] sm:$0xf]
        %v448 = vld [vmem:[%s4 + $0x10] sm:$0xf]
        %v449 = vld [vmem:[%s4 + $0x14] sm:$0xf]
        %v450 = vld [vmem:[%s4 + $0x18] sm:$0xf]
        %v451 = vld [vmem:[%s4 + $0x1c] sm:$0xf]
        %v452 = vld [vmem:[%s4 + $0x20] sm:$0xf]
        %v453 = vld [vmem:[%s4 + $0x24] sm:$0xf]
        %v454 = vld [vmem:[%s4 + $0x28] sm:$0xf]
        %v455 = vld [vmem:[%s4 + $0x2c] sm:$0xf]
        %457 = vrot.lane.b32.xlu0 %v432, 96
        %v458 = vpop.permute.xlu0 %457
        %vm459 = vcmask 64512
        %v461 = vsel %vm459, %v421, 0
        %v464 = vsel %vm459, %v458, 0
        %466 = vmatprep.subr.bf16.mxu0 0
        %467 = vmatpush1.bf16.xpose.msra.mxu0 %v464
        %468 = vmatprep.subr.bf16.mxu0 0
        %469 = vmatpush1.bf16.xpose.msra.mxu0 0
        %470 = vmatprep.subr.bf16.mxu0 0
        %471 = vmatpush1.bf16.xpose.msra.mxu0 0
        %472 = vmatprep.subr.bf16.mxu0 0
        %473 = vmatpush1.bf16.xpose.msra.mxu0 0
        %474 = vmatprep.subr.bf16.mxu0 0
        %475 = vmatpush1.bf16.xpose.msra.mxu0 0
        %476 = vmatprep.subr.bf16.mxu0 0
        %477 = vmatpush1.bf16.xpose.msra.mxu0 0
        %478 = vmatprep.subr.bf16.mxu0 0
        %479 = vmatpush1.bf16.xpose.msra.mxu0 0
        %480 = vmatprep.subr.bf16.mxu0 0
        %481 = vmatpush1.bf16.xpose.msra.mxu0 0
        %482 = vmatprep.subr.bf16.mxu0 0
        %483 = vmatpush1.bf16.xpose.msra.mxu0 0
        %484 = vmatprep.subr.bf16.mxu0 0
        %485 = vmatpush1.bf16.xpose.msra.mxu0 0
        %486 = vmatprep.subr.bf16.mxu0 0
        %487 = vmatpush1.bf16.xpose.msra.mxu0 0
        %488 = vmatprep.subr.bf16.mxu0 0
        %489 = vmatpush1.bf16.xpose.msra.mxu0 0
        %490 = vmatprep.subr.bf16.mxu0 0
        %491 = vmatpush1.bf16.xpose.msra.mxu0 0
        %492 = vmatprep.subr.bf16.mxu0 0
        %493 = vmatpush1.bf16.xpose.msra.mxu0 0
        %494 = vmatprep.subr.bf16.mxu0 0
        %495 = vmatpush1.bf16.xpose.msra.mxu0 0
        %496 = vmatprep.subr.bf16.mxu0 0
        %497 = vmatpush1.bf16.xpose.msra.mxu0 0
        %498 = vmatprep.mubr.bf16.mxu0 0
        %499 = vmatmul.mubr.bf16.gmra.mrb[0].mxu0 %v461
        %v500 = vpop.f32.mrb[0].mxu0
        %v501 = vadd.f32 %v302, %v500
        %v502 = vpop.f32.mrb[0].mxu0
        %v503 = vpop.f32.mrb[0].mxu0
        %v504 = vadd.f32 %v303, %v503
        %v505 = vpop.f32.mrb[0].mxu0
        %506 = vdwg.mxu0
        %vm507 = vcmask 130048
        %v508 = vsel %vm507, %v501, -inf
        %509 = vmax.xlane.f32.xlu0 %v508
        %v510 = vpop.xlane.xlu0 %509
        %v511 = vsel %vm507, %v504, -inf
        %512 = vmax.xlane.f32.xlu0 %v511
        %v513 = vpop.xlane.xlu0 %512
        %v514 = vsub.f32 %v501, %v510
        %v515 = vsub.f32 %v504, %v513
        %v516 = vmul.f32 %v514, 1.442695
        %v517 = vpow.pop %v516
        %v518 = vmul.f32 %v515, 1.442695
        %v519 = vpow.pop %v518
        %v520 = vsel %vm507, %v517, 0.0
        %521 = vadd.xlane.f32.xlu0 %v520
        %v522 = vpop.xlane.xlu0 %521
        %v523 = vsel %vm507, %v519, 0.0
        %524 = vadd.xlane.f32.xlu0 %v523
        %v525 = vpop.xlane.xlu0 %524
        %v526 = vrcp.pop %v522
        %v527 = vrcp.pop %v525
        %v528 = vmul.f32 %v517, %v526
        %v529 = vmul.f32 %v519, %v527
        %v530 = vpack.c.bf16 %v529, %v528
        %532 = vrot.lane.b32.xlu0 %v443, 64
        %v533 = vpop.permute.xlu0 %532
        %v536 = vsel %vm507, %v530, 0
        %538 = vmatprep.subr.bf16.mxu0 0
        %539 = vmatpush1.bf16.msra.mxu0 %v533
        %540 = vmatprep.subr.bf16.mxu0 0
        %541 = vmatpush1.bf16.msra.mxu0 0
        %542 = vmatprep.subr.bf16.mxu0 0
        %543 = vmatpush1.bf16.msra.mxu0 0
        %544 = vmatprep.subr.bf16.mxu0 0
        %545 = vmatpush1.bf16.msra.mxu0 0
        %546 = vmatprep.subr.bf16.mxu0 0
        %547 = vmatpush1.bf16.msra.mxu0 0
        %548 = vmatprep.subr.bf16.mxu0 0
        %549 = vmatpush1.bf16.msra.mxu0 0
        %550 = vmatprep.subr.bf16.mxu0 0
        %551 = vmatpush1.bf16.msra.mxu0 0
        %552 = vmatprep.subr.bf16.mxu0 0
        %553 = vmatpush1.bf16.msra.mxu0 0
        %554 = vmatprep.subr.bf16.mxu0 0
        %555 = vmatpush1.bf16.msra.mxu0 0
        %556 = vmatprep.subr.bf16.mxu0 0
        %557 = vmatpush1.bf16.msra.mxu0 0
        %558 = vmatprep.subr.bf16.mxu0 0
        %559 = vmatpush1.bf16.msra.mxu0 0
        %560 = vmatprep.subr.bf16.mxu0 0
        %561 = vmatpush1.bf16.msra.mxu0 0
        %562 = vmatprep.subr.bf16.mxu0 0
        %563 = vmatpush1.bf16.msra.mxu0 0
        %564 = vmatprep.subr.bf16.mxu0 0
        %565 = vmatpush1.bf16.msra.mxu0 0
        %566 = vmatprep.subr.bf16.mxu0 0
        %567 = vmatpush1.bf16.msra.mxu0 0
        %568 = vmatprep.subr.bf16.mxu0 0
        %569 = vmatpush1.bf16.msra.mxu0 0
        %570 = vmatprep.mubr.bf16.mxu0 0
        %571 = vmatmul.mubr.bf16.gmra.mrb[0].mxu0 %v536
        %v572 = vpop.f32.mrb[0].mxu0
        %v573 = vadd.f32 0.0, %v572
        %v574 = vpop.f32.mrb[0].mxu0
        %v575 = vpop.f32.mrb[0].mxu0
        %v576 = vadd.f32 0.0, %v575
        %v577 = vpop.f32.mrb[0].mxu0
        %578 = vdwg.mxu0
        %579 = vst.msk [vmem:[#allocation2] sm:$0xff] %vm459, %v573
        %580 = vst.msk [vmem:[#allocation2 + $0x8] sm:$0xff] %vm459, %v576
        %582 = vrot.lane.b32.xlu0 %v421, 120
        %v583 = vpop.permute.xlu0 %582
        %584 = vrot.lane.b32.xlu0 %v432, 88
        %v585 = vpop.permute.xlu0 %584
        %v587 = vsel %vm459, %v583, 0
        %v590 = vsel %vm459, %v585, 0
        %592 = vmatprep.subr.bf16.mxu0 0
        %593 = vmatpush1.bf16.xpose.msra.mxu0 %v590
        %594 = vmatprep.subr.bf16.mxu0 0
        %595 = vmatpush1.bf16.xpose.msra.mxu0 0
        %596 = vmatprep.subr.bf16.mxu0 0
        %597 = vmatpush1.bf16.xpose.msra.mxu0 0
        %598 = vmatprep.subr.bf16.mxu0 0
        %599 = vmatpush1.bf16.xpose.msra.mxu0 0
        %600 = vmatprep.subr.bf16.mxu0 0
        %601 = vmatpush1.bf16.xpose.msra.mxu0 0
        %602 = vmatprep.subr.bf16.mxu0 0
        %603 = vmatpush1.bf16.xpose.msra.mxu0 0
        %604 = vmatprep.subr.bf16.mxu0 0
        %605 = vmatpush1.bf16.xpose.msra.mxu0 0
        %606 = vmatprep.subr.bf16.mxu0 0
        %607 = vmatpush1.bf16.xpose.msra.mxu0 0
        %608 = vmatprep.subr.bf16.mxu0 0
        %609 = vmatpush1.bf16.xpose.msra.mxu0 0
        %610 = vmatprep.subr.bf16.mxu0 0
        %611 = vmatpush1.bf16.xpose.msra.mxu0 0
        %612 = vmatprep.subr.bf16.mxu0 0
        %613 = vmatpush1.bf16.xpose.msra.mxu0 0
        %614 = vmatprep.subr.bf16.mxu0 0
        %615 = vmatpush1.bf16.xpose.msra.mxu0 0
        %616 = vmatprep.subr.bf16.mxu0 0
        %617 = vmatpush1.bf16.xpose.msra.mxu0 0
        %618 = vmatprep.subr.bf16.mxu0 0
        %619 = vmatpush1.bf16.xpose.msra.mxu0 0
        %620 = vmatprep.subr.bf16.mxu0 0
        %621 = vmatpush1.bf16.xpose.msra.mxu0 0
        %622 = vmatprep.subr.bf16.mxu0 0
        %623 = vmatpush1.bf16.xpose.msra.mxu0 0
        %624 = vmatprep.mubr.bf16.mxu0 0
        %625 = vmatmul.mubr.bf16.gmra.mrb[0].mxu0 %v587
        %v626 = vpop.f32.mrb[0].mxu0
        %v627 = vadd.f32 %v302, %v626
        %v628 = vpop.f32.mrb[0].mxu0
        %v629 = vpop.f32.mrb[0].mxu0
        %v630 = vadd.f32 %v303, %v629
        %v631 = vpop.f32.mrb[0].mxu0
        %632 = vdwg.mxu0
        %v633 = vsel %vm507, %v627, -inf
        %634 = vmax.xlane.f32.xlu0 %v633
        %v635 = vpop.xlane.xlu0 %634
        %v636 = vsel %vm507, %v630, -inf
        %637 = vmax.xlane.f32.xlu0 %v636
        %v638 = vpop.xlane.xlu0 %637
        %v639 = vsub.f32 %v627, %v635
        %v640 = vsub.f32 %v630, %v638
        %v641 = vmul.f32 %v639, 1.442695
        %v642 = vpow.pop %v641
        %v643 = vmul.f32 %v640, 1.442695
        %v644 = vpow.pop %v643
        %v645 = vsel %vm507, %v642, 0.0
        %646 = vadd.xlane.f32.xlu0 %v645
        %v647 = vpop.xlane.xlu0 %646
        %v648 = vsel %vm507, %v644, 0.0
        %649 = vadd.xlane.f32.xlu0 %v648
        %v650 = vpop.xlane.xlu0 %649
        %v651 = vrcp.pop %v647
        %v652 = vrcp.pop %v650
        %v653 = vmul.f32 %v642, %v651
        %v654 = vmul.f32 %v644, %v652
        %v655 = vpack.c.bf16 %v654, %v653
        %656 = vrot.lane.b32.xlu0 %v443, 56
        %v657 = vpop.permute.xlu0 %656
        %v660 = vsel %vm507, %v655, 0
        %662 = vmatprep.subr.bf16.mxu0 0
        %663 = vmatpush1.bf16.msra.mxu0 %v657
        %664 = vmatprep.subr.bf16.mxu0 0
        %665 = vmatpush1.bf16.msra.mxu0 0
        %666 = vmatprep.subr.bf16.mxu0 0
        %667 = vmatpush1.bf16.msra.mxu0 0
        %668 = vmatprep.subr.bf16.mxu0 0
        %669 = vmatpush1.bf16.msra.mxu0 0
        %670 = vmatprep.subr.bf16.mxu0 0
        %671 = vmatpush1.bf16.msra.mxu0 0
        %672 = vmatprep.subr.bf16.mxu0 0
        %673 = vmatpush1.bf16.msra.mxu0 0
        %674 = vmatprep.subr.bf16.mxu0 0
        %675 = vmatpush1.bf16.msra.mxu0 0
        %676 = vmatprep.subr.bf16.mxu0 0
        %677 = vmatpush1.bf16.msra.mxu0 0
        %678 = vmatprep.subr.bf16.mxu0 0
        %679 = vmatpush1.bf16.msra.mxu0 0
        %680 = vmatprep.subr.bf16.mxu0 0
        %681 = vmatpush1.bf16.msra.mxu0 0
        %682 = vmatprep.subr.bf16.mxu0 0
        %683 = vmatpush1.bf16.msra.mxu0 0
        %684 = vmatprep.subr.bf16.mxu0 0
        %685 = vmatpush1.bf16.msra.mxu0 0
        %686 = vmatprep.subr.bf16.mxu0 0
        %687 = vmatpush1.bf16.msra.mxu0 0
        %688 = vmatprep.subr.bf16.mxu0 0
        %689 = vmatpush1.bf16.msra.mxu0 0
        %690 = vmatprep.subr.bf16.mxu0 0
        %691 = vmatpush1.bf16.msra.mxu0 0
        %692 = vmatprep.subr.bf16.mxu0 0
        %693 = vmatpush1.bf16.msra.mxu0 0
        %694 = vmatprep.mubr.bf16.mxu0 0
        %695 = vmatmul.mubr.bf16.gmra.mrb[0].mxu0 %v660
        %v696 = vpop.f32.mrb[0].mxu0
        %v697 = vadd.f32 0.0, %v696
        %v698 = vpop.f32.mrb[0].mxu0
        %v699 = vpop.f32.mrb[0].mxu0
        %v700 = vadd.f32 0.0, %v699
        %v701 = vpop.f32.mrb[0].mxu0
        %702 = vdwg.mxu0
        %705 = vrot.lane.b32.xlu0 %v697, 8
        %v706 = vpop.permute.xlu0 %705
        %707 = vrot.lane.b32.xlu0 %v700, 8
        %v708 = vpop.permute.xlu0 %707
        %vm711 = vcmask 130112
        %712 = vst.msk [vmem:[#allocation2] sm:$0xff] %vm711, %v706
        %713 = vst.msk [vmem:[#allocation2 + $0x8] sm:$0xff] %vm711, %v708
        %714 = vrot.lane.b32.xlu0 %v421, 112
        %v715 = vpop.permute.xlu0 %714
        %716 = vrot.lane.b32.xlu0 %v432, 80
        %v717 = vpop.permute.xlu0 %716
        %v719 = vsel %vm459, %v715, 0
        %v722 = vsel %vm459, %v717, 0
        %724 = vmatprep.subr.bf16.mxu0 0
        %725 = vmatpush1.bf16.xpose.msra.mxu0 %v722
        %726 = vmatprep.subr.bf16.mxu0 0
        %727 = vmatpush1.bf16.xpose.msra.mxu0 0
        %728 = vmatprep.subr.bf16.mxu0 0
        %729 = vmatpush1.bf16.xpose.msra.mxu0 0
        %730 = vmatprep.subr.bf16.mxu0 0
        %731 = vmatpush1.bf16.xpose.msra.mxu0 0
        %732 = vmatprep.subr.bf16.mxu0 0
        %733 = vmatpush1.bf16.xpose.msra.mxu0 0
        %734 = vmatprep.subr.bf16.mxu0 0
        %735 = vmatpush1.bf16.xpose.msra.mxu0 0
        %736 = vmatprep.subr.bf16.mxu0 0
        %737 = vmatpush1.bf16.xpose.msra.mxu0 0
        %738 = vmatprep.subr.bf16.mxu0 0
        %739 = vmatpush1.bf16.xpose.msra.mxu0 0
        %740 = vmatprep.subr.bf16.mxu0 0
        %741 = vmatpush1.bf16.xpose.msra.mxu0 0
        %742 = vmatprep.subr.bf16.mxu0 0
        %743 = vmatpush1.bf16.xpose.msra.mxu0 0
        %744 = vmatprep.subr.bf16.mxu0 0
        %745 = vmatpush1.bf16.xpose.msra.mxu0 0
        %746 = vmatprep.subr.bf16.mxu0 0
        %747 = vmatpush1.bf16.xpose.msra.mxu0 0
        %748 = vmatprep.subr.bf16.mxu0 0
        %749 = vmatpush1.bf16.xpose.msra.mxu0 0
        %750 = vmatprep.subr.bf16.mxu0 0
        %751 = vmatpush1.bf16.xpose.msra.mxu0 0
        %752 = vmatprep.subr.bf16.mxu0 0
        %753 = vmatpush1.bf16.xpose.msra.mxu0 0
        %754 = vmatprep.subr.bf16.mxu0 0
        %755 = vmatpush1.bf16.xpose.msra.mxu0 0
        %756 = vmatprep.mubr.bf16.mxu0 0
        %757 = vmatmul.mubr.bf16.gmra.mrb[0].mxu0 %v719
        %v758 = vpop.f32.mrb[0].mxu0
        %v759 = vadd.f32 %v302, %v758
        %v760 = vpop.f32.mrb[0].mxu0
        %v761 = vpop.f32.mrb[0].mxu0
        %v762 = vadd.f32 %v303, %v761
        %v763 = vpop.f32.mrb[0].mxu0
        %764 = vdwg.mxu0
        %v765 = vsel %vm507, %v759, -inf
        %766 = vmax.xlane.f32.xlu0 %v765
        %v767 = vpop.xlane.xlu0 %766
        %v768 = vsel %vm507, %v762, -inf
        %769 = vmax.xlane.f32.xlu0 %v768
        %v770 = vpop.xlane.xlu0 %769
        %v771 = vsub.f32 %v759, %v767
        %v772 = vsub.f32 %v762, %v770
        %v773 = vmul.f32 %v771, 1.442695
        %v774 = vpow.pop %v773
        %v775 = vmul.f32 %v772, 1.442695
        %v776 = vpow.pop %v775
        %v777 = vsel %vm507, %v774, 0.0
        %778 = vadd.xlane.f32.xlu0 %v777
        %v779 = vpop.xlane.xlu0 %778
        %v780 = vsel %vm507, %v776, 0.0
        %781 = vadd.xlane.f32.xlu0 %v780
        %v782 = vpop.xlane.xlu0 %781
        %v783 = vrcp.pop %v779
        %v784 = vrcp.pop %v782
        %v785 = vmul.f32 %v774, %v783
        %v786 = vmul.f32 %v776, %v784
        %v787 = vpack.c.bf16 %v786, %v785
        %788 = vrot.lane.b32.xlu0 %v443, 48
        %v789 = vpop.permute.xlu0 %788
        %v792 = vsel %vm507, %v787, 0
        %794 = vmatprep.subr.bf16.mxu0 0
        %795 = vmatpush1.bf16.msra.mxu0 %v789
        %796 = vmatprep.subr.bf16.mxu0 0
        %797 = vmatpush1.bf16.msra.mxu0 0
        %798 = vmatprep.subr.bf16.mxu0 0
        %799 = vmatpush1.bf16.msra.mxu0 0
        %800 = vmatprep.subr.bf16.mxu0 0
        %801 = vmatpush1.bf16.msra.mxu0 0
        %802 = vmatprep.subr.bf16.mxu0 0
        %803 = vmatpush1.bf16.msra.mxu0 0
        %804 = vmatprep.subr.bf16.mxu0 0
        %805 = vmatpush1.bf16.msra.mxu0 0
        %806 = vmatprep.subr.bf16.mxu0 0
        %807 = vmatpush1.bf16.msra.mxu0 0
        %808 = vmatprep.subr.bf16.mxu0 0
        %809 = vmatpush1.bf16.msra.mxu0 0
        %810 = vmatprep.subr.bf16.mxu0 0
        %811 = vmatpush1.bf16.msra.mxu0 0
        %812 = vmatprep.subr.bf16.mxu0 0
        %813 = vmatpush1.bf16.msra.mxu0 0
        %814 = vmatprep.subr.bf16.mxu0 0
        %815 = vmatpush1.bf16.msra.mxu0 0
        %816 = vmatprep.subr.bf16.mxu0 0
        %817 = vmatpush1.bf16.msra.mxu0 0
        %818 = vmatprep.subr.bf16.mxu0 0
        %819 = vmatpush1.bf16.msra.mxu0 0
        %820 = vmatprep.subr.bf16.mxu0 0
        %821 = vmatpush1.bf16.msra.mxu0 0
        %822 = vmatprep.subr.bf16.mxu0 0
        %823 = vmatpush1.bf16.msra.mxu0 0
        %824 = vmatprep.subr.bf16.mxu0 0
        %825 = vmatpush1.bf16.msra.mxu0 0
        %826 = vmatprep.mubr.bf16.mxu0 0
        %827 = vmatmul.mubr.bf16.gmra.mrb[0].mxu0 %v792
        %v828 = vpop.f32.mrb[0].mxu0
        %v829 = vadd.f32 0.0, %v828
        %v830 = vpop.f32.mrb[0].mxu0
        %v831 = vpop.f32.mrb[0].mxu0
        %v832 = vadd.f32 0.0, %v831
        %v833 = vpop.f32.mrb[0].mxu0
        %834 = vdwg.mxu0
        %837 = vrot.lane.b32.xlu0 %v829, 16
        %v838 = vpop.permute.xlu0 %837
        %839 = vrot.lane.b32.xlu0 %v832, 16
        %v840 = vpop.permute.xlu0 %839
        %vm843 = vcmask 195712
        %844 = vst.msk [vmem:[#allocation2] sm:$0xff] %vm843, %v838
        %845 = vst.msk [vmem:[#allocation2 + $0x8] sm:$0xff] %vm843, %v840
        %846 = vrot.lane.b32.xlu0 %v421, 104
        %v847 = vpop.permute.xlu0 %846
        %848 = vrot.lane.b32.xlu0 %v432, 72
        %v849 = vpop.permute.xlu0 %848
        %v851 = vsel %vm459, %v847, 0
        %v854 = vsel %vm459, %v849, 0
        %856 = vmatprep.subr.bf16.mxu0 0
        %857 = vmatpush1.bf16.xpose.msra.mxu0 %v854
        %858 = vmatprep.subr.bf16.mxu0 0
        %859 = vmatpush1.bf16.xpose.msra.mxu0 0
        %860 = vmatprep.subr.bf16.mxu0 0
        %861 = vmatpush1.bf16.xpose.msra.mxu0 0
        %862 = vmatprep.subr.bf16.mxu0 0
        %863 = vmatpush1.bf16.xpose.msra.mxu0 0
        %864 = vmatprep.subr.bf16.mxu0 0
        %865 = vmatpush1.bf16.xpose.msra.mxu0 0
        %866 = vmatprep.subr.bf16.mxu0 0
        %867 = vmatpush1.bf16.xpose.msra.mxu0 0
        %868 = vmatprep.subr.bf16.mxu0 0
        %869 = vmatpush1.bf16.xpose.msra.mxu0 0
        %870 = vmatprep.subr.bf16.mxu0 0
        %871 = vmatpush1.bf16.xpose.msra.mxu0 0
        %872 = vmatprep.subr.bf16.mxu0 0
        %873 = vmatpush1.bf16.xpose.msra.mxu0 0
        %874 = vmatprep.subr.bf16.mxu0 0
        %875 = vmatpush1.bf16.xpose.msra.mxu0 0
        %876 = vmatprep.subr.bf16.mxu0 0
        %877 = vmatpush1.bf16.xpose.msra.mxu0 0
        %878 = vmatprep.subr.bf16.mxu0 0
        %879 = vmatpush1.bf16.xpose.msra.mxu0 0
        %880 = vmatprep.subr.bf16.mxu0 0
        %881 = vmatpush1.bf16.xpose.msra.mxu0 0
        %882 = vmatprep.subr.bf16.mxu0 0
        %883 = vmatpush1.bf16.xpose.msra.mxu0 0
        %884 = vmatprep.subr.bf16.mxu0 0
        %885 = vmatpush1.bf16.xpose.msra.mxu0 0
        %886 = vmatprep.subr.bf16.mxu0 0
        %887 = vmatpush1.bf16.xpose.msra.mxu0 0
        %888 = vmatprep.mubr.bf16.mxu0 0
        %889 = vmatmul.mubr.bf16.gmra.mrb[0].mxu0 %v851
        %v890 = vpop.f32.mrb[0].mxu0
        %v891 = vadd.f32 %v302, %v890
        %v892 = vpop.f32.mrb[0].mxu0
        %v893 = vpop.f32.mrb[0].mxu0
        %v894 = vadd.f32 %v303, %v893
        %v895 = vpop.f32.mrb[0].mxu0
        %896 = vdwg.mxu0
        %v897 = vsel %vm507, %v891, -inf
        %898 = vmax.xlane.f32.xlu0 %v897
        %v899 = vpop.xlane.xlu0 %898
        %v900 = vsel %vm507, %v894, -inf
        %901 = vmax.xlane.f32.xlu0 %v900
        %v902 = vpop.xlane.xlu0 %901
        %v903 = vsub.f32 %v891, %v899
        %v904 = vsub.f32 %v894, %v902
        %v905 = vmul.f32 %v903, 1.442695
        %v906 = vpow.pop %v905
        %v907 = vmul.f32 %v904, 1.442695
        %v908 = vpow.pop %v907
        %v909 = vsel %vm507, %v906, 0.0
        %910 = vadd.xlane.f32.xlu0 %v909
        %v911 = vpop.xlane.xlu0 %910
        %v912 = vsel %vm507, %v908, 0.0
        %913 = vadd.xlane.f32.xlu0 %v912
        %v914 = vpop.xlane.xlu0 %913
        %v915 = vrcp.pop %v911
        %v916 = vrcp.pop %v914
        %v917 = vmul.f32 %v906, %v915
        %v918 = vmul.f32 %v908, %v916
        %v919 = vpack.c.bf16 %v918, %v917
        %920 = vrot.lane.b32.xlu0 %v443, 40
        %v921 = vpop.permute.xlu0 %920
        %v924 = vsel %vm507, %v919, 0
        %926 = vmatprep.subr.bf16.mxu0 0
        %927 = vmatpush1.bf16.msra.mxu0 %v921
        %928 = vmatprep.subr.bf16.mxu0 0
        %929 = vmatpush1.bf16.msra.mxu0 0
        %930 = vmatprep.subr.bf16.mxu0 0
        %931 = vmatpush1.bf16.msra.mxu0 0
        %932 = vmatprep.subr.bf16.mxu0 0
        %933 = vmatpush1.bf16.msra.mxu0 0
        %934 = vmatprep.subr.bf16.mxu0 0
        %935 = vmatpush1.bf16.msra.mxu0 0
        %936 = vmatprep.subr.bf16.mxu0 0
        %937 = vmatpush1.bf16.msra.mxu0 0
        %938 = vmatprep.subr.bf16.mxu0 0
        %939 = vmatpush1.bf16.msra.mxu0 0
        %940 = vmatprep.subr.bf16.mxu0 0
        %941 = vmatpush1.bf16.msra.mxu0 0
        %942 = vmatprep.subr.bf16.mxu0 0
        %943 = vmatpush1.bf16.msra.mxu0 0
        %944 = vmatprep.subr.bf16.mxu0 0
        %945 = vmatpush1.bf16.msra.mxu0 0
        %946 = vmatprep.subr.bf16.mxu0 0
        %947 = vmatpush1.bf16.msra.mxu0 0
        %948 = vmatprep.subr.bf16.mxu0 0
        %949 = vmatpush1.bf16.msra.mxu0 0
        %950 = vmatprep.subr.bf16.mxu0 0
        %951 = vmatpush1.bf16.msra.mxu0 0
        %952 = vmatprep.subr.bf16.mxu0 0
        %953 = vmatpush1.bf16.msra.mxu0 0
        %954 = vmatprep.subr.bf16.mxu0 0
        %955 = vmatpush1.bf16.msra.mxu0 0
        %956 = vmatprep.subr.bf16.mxu0 0
        %957 = vmatpush1.bf16.msra.mxu0 0
        %958 = vmatprep.mubr.bf16.mxu0 0
        %959 = vmatmul.mubr.bf16.gmra.mrb[0].mxu0 %v924
        %v960 = vpop.f32.mrb[0].mxu0
        %v961 = vadd.f32 0.0, %v960
        %v962 = vpop.f32.mrb[0].mxu0
        %v963 = vpop.f32.mrb[0].mxu0
        %v964 = vadd.f32 0.0, %v963
        %v965 = vpop.f32.mrb[0].mxu0
        %966 = vdwg.mxu0
        %969 = vrot.lane.b32.xlu0 %v961, 24
        %v970 = vpop.permute.xlu0 %969
        %971 = vrot.lane.b32.xlu0 %v964, 24
        %v972 = vpop.permute.xlu0 %971
        %vm975 = vcmask 261312
        %976 = vst.msk [vmem:[#allocation2] sm:$0xff] %vm975, %v970
        %977 = vst.msk [vmem:[#allocation2 + $0x8] sm:$0xff] %vm975, %v972
        %v978 = vld [vmem:[#allocation2] sm:$0xff]
        %v979 = vld [vmem:[#allocation2 + $0x8] sm:$0xff]
        %v980 = vpack.c.bf16 %v979, %v978
        %v981 = vlaneseq
        %v982 = vshrl.u32 %v981, 7
        %v983 = vsub.s32 0, %v982
        %v984 = vrot.slane %v309, %v983
        %v989 = vunpack.c.l.b16 %v444
        %v990 = vunpack.c.l.b16 %v445
        %v991 = vunpack.c.l.b16 %v446
        %v992 = vunpack.c.l.b16 %v447
        %v993 = vpack.c.b16 %v990, %v989
        %v994 = vpack.c.b16 %v992, %v991
        %v998 = vsel %vm314, %v980, 0
        %1000 = vmatprep.subr.bf16.mxu0 0
        %1001 = vmatpush1.bf16.msra.mxu0 %v993
        %1002 = vmatprep.subr.bf16.mxu0 0
        %1003 = vmatpush1.bf16.msra.mxu0 %v994
        %1004 = vmatprep.subr.bf16.mxu0 0
        %1005 = vmatpush1.bf16.msra.mxu0 0
        %1006 = vmatprep.subr.bf16.mxu0 0
        %1007 = vmatpush1.bf16.msra.mxu0 0
        %1008 = vmatprep.subr.bf16.mxu0 0
        %1009 = vmatpush1.bf16.msra.mxu0 0
        %1010 = vmatprep.subr.bf16.mxu0 0
        %1011 = vmatpush1.bf16.msra.mxu0 0
        %1012 = vmatprep.subr.bf16.mxu0 0
        %1013 = vmatpush1.bf16.msra.mxu0 0
        %1014 = vmatprep.subr.bf16.mxu0 0
        %1015 = vmatpush1.bf16.msra.mxu0 0
        %1016 = vmatprep.subr.bf16.mxu0 0
        %1017 = vmatpush1.bf16.msra.mxu0 0
        %1018 = vmatprep.subr.bf16.mxu0 0
        %1019 = vmatpush1.bf16.msra.mxu0 0
        %1020 = vmatprep.subr.bf16.mxu0 0
        %1021 = vmatpush1.bf16.msra.mxu0 0
        %1022 = vmatprep.subr.bf16.mxu0 0
        %1023 = vmatpush1.bf16.msra.mxu0 0
        %1024 = vmatprep.subr.bf16.mxu0 0
        %1025 = vmatpush1.bf16.msra.mxu0 0
        %1026 = vmatprep.subr.bf16.mxu0 0
        %1027 = vmatpush1.bf16.msra.mxu0 0
        %1028 = vmatprep.subr.bf16.mxu0 0
        %1029 = vmatpush1.bf16.msra.mxu0 0
        %1030 = vmatprep.subr.bf16.mxu0 0
        %1031 = vmatpush1.bf16.msra.mxu0 0
        %1032 = vmatprep.mubr.bf16.mxu0 0
        %1033 = vmatmul.mubr.bf16.gmra.mrb[0].mxu0 %v998
        %v1034 = vpop.f32.mrb[0].mxu0
        %v1035 = vadd.f32 %v984, %v1034
        %v1036 = vpop.f32.mrb[0].mxu0
        %v1037 = vpop.f32.mrb[0].mxu0
        %v1038 = vadd.f32 %v984, %v1037
        %v1039 = vpop.f32.mrb[0].mxu0
        %1040 = vdwg.mxu0
        %v1041 = vadd.f32 %v1035, %v285
        %v1042 = vadd.f32 %v1038, %v286
        %v1043 = vsel %vm314, %v1041, 0.0
        %1044 = vadd.xlane.f32.xlu0 %v1043
        %v1045 = vpop.xlane.xlu0 %1044
        %v1046 = vsel %vm314, %v1042, 0.0
        %1047 = vadd.xlane.f32.xlu0 %v1046
        %v1048 = vpop.xlane.xlu0 %1047
        %v1049 = vmul.f32 %v1045, %v321
        %v1050 = vmul.f32 %v1048, %v321
        %v1051 = vsub.f32 %v1041, %v1049
        %v1052 = vsub.f32 %v1042, %v1050
        %v1053 = vmul.f32 %v1051, %v1051
        %v1054 = vmul.f32 %v1052, %v1052
        %v1055 = vsel %vm314, %v1053, 0.0
        %1056 = vadd.xlane.f32.xlu0 %v1055
        %v1057 = vpop.xlane.xlu0 %1056
        %v1058 = vsel %vm314, %v1054, 0.0
        %1059 = vadd.xlane.f32.xlu0 %v1058
        %v1060 = vpop.xlane.xlu0 %1059
        %v1061 = vmul.f32 %v1057, %v321
        %v1062 = vmul.f32 %v1060, %v321
        %v1063 = vadd.f32 %v1061, 1e-05
        %v1064 = vadd.f32 %v1062, 1e-05
        %v1065 = vrsqrt.pop %v1063
        %v1066 = vrsqrt.pop %v1064
        %v1067 = vmul.f32 %v1051, %v1065
        %v1068 = vmul.f32 %v1052, %v1066
        %v1069 = vlaneseq
        %v1070 = vshrl.u32 %v1069, 7
        %v1071 = vsub.s32 0, %v1070
        %v1072 = vrot.slane %v310, %v1071
        %v1073 = vmul.f32 %v1067, %v1072
        %v1074 = vmul.f32 %v1068, %v1072
        %v1075 = vlaneseq
        %v1076 = vshrl.u32 %v1075, 7
        %v1077 = vsub.s32 0, %v1076
        %v1078 = vrot.slane %v311, %v1077
        %v1079 = vadd.f32 %v1073, %v1078
        %v1080 = vadd.f32 %v1074, %v1078
        %v1081 = vpack.c.bf16 %v1080, %v1079
        %v1082 = vlaneseq
        %v1083 = vshrl.u32 %v1082, 7
        %v1084 = vsub.s32 0, %v1083
        %v1085 = vrot.slane %v312, %v1084
        %v1090 = vunpack.c.l.b16 %v448
        %v1091 = vunpack.c.l.b16 %v449
        %v1092 = vunpack.c.l.b16 %v450
        %v1093 = vunpack.c.l.b16 %v451
        %v1094 = vpack.c.b16 %v1091, %v1090
        %v1095 = vpack.c.b16 %v1093, %v1092
        %v1099 = vsel %vm314, %v1081, 0
        %1101 = vmatprep.subr.bf16.mxu0 0
        %1102 = vmatpush1.bf16.msra.mxu0 %v1094
        %1103 = vmatprep.subr.bf16.mxu0 0
        %1104 = vmatpush1.bf16.msra.mxu0 %v1095
        %1105 = vmatprep.subr.bf16.mxu0 0
        %1106 = vmatpush1.bf16.msra.mxu0 0
        %1107 = vmatprep.subr.bf16.mxu0 0
        %1108 = vmatpush1.bf16.msra.mxu0 0
        %1109 = vmatprep.subr.bf16.mxu0 0
        %1110 = vmatpush1.bf16.msra.mxu0 0
        %1111 = vmatprep.subr.bf16.mxu0 0
        %1112 = vmatpush1.bf16.msra.mxu0 0
        %1113 = vmatprep.subr.bf16.mxu0 0
        %1114 = vmatpush1.bf16.msra.mxu0 0
        %1115 = vmatprep.subr.bf16.mxu0 0
        %1116 = vmatpush1.bf16.msra.mxu0 0
        %1117 = vmatprep.subr.bf16.mxu0 0
        %1118 = vmatpush1.bf16.msra.mxu0 0
        %1119 = vmatprep.subr.bf16.mxu0 0
        %1120 = vmatpush1.bf16.msra.mxu0 0
        %1121 = vmatprep.subr.bf16.mxu0 0
        %1122 = vmatpush1.bf16.msra.mxu0 0
        %1123 = vmatprep.subr.bf16.mxu0 0
        %1124 = vmatpush1.bf16.msra.mxu0 0
        %1125 = vmatprep.subr.bf16.mxu0 0
        %1126 = vmatpush1.bf16.msra.mxu0 0
        %1127 = vmatprep.subr.bf16.mxu0 0
        %1128 = vmatpush1.bf16.msra.mxu0 0
        %1129 = vmatprep.subr.bf16.mxu0 0
        %1130 = vmatpush1.bf16.msra.mxu0 0
        %1131 = vmatprep.subr.bf16.mxu0 0
        %1132 = vmatpush1.bf16.msra.mxu0 0
        %1133 = vmatprep.mubr.bf16.mxu0 0
        %1134 = vmatmul.mubr.bf16.gmra.mrb[0].mxu0 %v1099
        %v1135 = vpop.f32.mrb[0].mxu0
        %v1136 = vadd.f32 %v1085, %v1135
        %v1137 = vpop.f32.mrb[0].mxu0
        %v1138 = vpop.f32.mrb[0].mxu0
        %v1139 = vadd.f32 %v1085, %v1138
        %v1140 = vpop.f32.mrb[0].mxu0
        %1141 = vdwg.mxu0
        %v1142 = vxor.u32 %v1136, 2147483648
        %v1143 = vxor.u32 %v1139, 2147483648
        %v1144 = vmul.f32 %v1142, 1.442695
        %v1145 = vpow.pop %v1144
        %v1146 = vmul.f32 %v1143, 1.442695
        %v1147 = vpow.pop %v1146
        %v1148 = vadd.f32 %v1145, 1.0
        %v1149 = vadd.f32 %v1147, 1.0
        %v1150 = vrcp.pop %v1148
        %v1151 = vmul.f32 1.0, %v1150
        %v1152 = vrcp.pop %v1149
        %v1153 = vmul.f32 1.0, %v1152
        %v1154 = vmul.f32 %v1136, %v1151
        %v1155 = vmul.f32 %v1139, %v1153
        %v1156 = vpack.c.bf16 %v1155, %v1154
        %v1157 = vlaneseq
        %v1158 = vshrl.u32 %v1157, 7
        %v1159 = vsub.s32 0, %v1158
        %v1160 = vrot.slane %v313, %v1159
        %v1165 = vunpack.c.l.b16 %v452
        %v1166 = vunpack.c.l.b16 %v453
        %v1167 = vunpack.c.l.b16 %v454
        %v1168 = vunpack.c.l.b16 %v455
        %v1169 = vpack.c.b16 %v1166, %v1165
        %v1170 = vpack.c.b16 %v1168, %v1167
        %v1174 = vsel %vm314, %v1156, 0
        %1176 = vmatprep.subr.bf16.mxu0 0
        %1177 = vmatpush1.bf16.msra.mxu0 %v1169
        %1178 = vmatprep.subr.bf16.mxu0 0
        %1179 = vmatpush1.bf16.msra.mxu0 %v1170
        %1180 = vmatprep.subr.bf16.mxu0 0
        %1181 = vmatpush1.bf16.msra.mxu0 0
        %1182 = vmatprep.subr.bf16.mxu0 0
        %1183 = vmatpush1.bf16.msra.mxu0 0
        %1184 = vmatprep.subr.bf16.mxu0 0
        %1185 = vmatpush1.bf16.msra.mxu0 0
        %1186 = vmatprep.subr.bf16.mxu0 0
        %1187 = vmatpush1.bf16.msra.mxu0 0
        %1188 = vmatprep.subr.bf16.mxu0 0
        %1189 = vmatpush1.bf16.msra.mxu0 0
        %1190 = vmatprep.subr.bf16.mxu0 0
        %1191 = vmatpush1.bf16.msra.mxu0 0
        %1192 = vmatprep.subr.bf16.mxu0 0
        %1193 = vmatpush1.bf16.msra.mxu0 0
        %1194 = vmatprep.subr.bf16.mxu0 0
        %1195 = vmatpush1.bf16.msra.mxu0 0
        %1196 = vmatprep.subr.bf16.mxu0 0
        %1197 = vmatpush1.bf16.msra.mxu0 0
        %1198 = vmatprep.subr.bf16.mxu0 0
        %1199 = vmatpush1.bf16.msra.mxu0 0
        %1200 = vmatprep.subr.bf16.mxu0 0
        %1201 = vmatpush1.bf16.msra.mxu0 0
        %1202 = vmatprep.subr.bf16.mxu0 0
        %1203 = vmatpush1.bf16.msra.mxu0 0
        %1204 = vmatprep.subr.bf16.mxu0 0
        %1205 = vmatpush1.bf16.msra.mxu0 0
        %1206 = vmatprep.subr.bf16.mxu0 0
        %1207 = vmatpush1.bf16.msra.mxu0 0
        %1208 = vmatprep.mubr.bf16.mxu0 0
        %1209 = vmatmul.mubr.bf16.gmra.mrb[0].mxu0 %v1174
        %v1210 = vpop.f32.mrb[0].mxu0
        %v1211 = vadd.f32 %v1160, %v1210
        %v1212 = vpop.f32.mrb[0].mxu0
        %v1213 = vpop.f32.mrb[0].mxu0
        %v1214 = vadd.f32 %v1160, %v1213
        %v1215 = vpop.f32.mrb[0].mxu0
        %1216 = vdwg.mxu0
        %v1217 = vadd.f32 %v1211, %v1041
        %v1218 = vadd.f32 %v1214, %v1042
        %1219 = vst.msk [vmem:[%s270] sm:$0xff] %vm314, %v1217
        %1220 = vst.msk [vmem:[%s270 + $0x8] sm:$0xff] %vm314, %v1218
        %s1221 = sand.u32 %s169, 1
        %s1222 = scalar_lea.sflag [#allocation4], %s1221
        %s1223 = sand.u32 %s169, 1
        %s1224 = smul.addr %s1223, 16
        %s1225 = scalar_lea.vmem [#allocation3], %s1224
        // Predicated region
        $region45: #{tpu_custom_call.1} parent=43 // pred_check
          %p1226 = pneg %p179
        $region46: #{tpu_custom_call.1} parent=43 // pred_check_branch
          %1228 = sbr.rel (%p1226) target = $region48
        $region47: #{tpu_custom_call.1} parent=43 // pred_region
          %s1230 = ssub.s32 256, 256
          %1231 = vsyncadd %s1222, %s1230
          %s1232 = smul.addr %s20, 2
          %s1233 = smul.addr %s1232, 128
          %s1234 = scalar_lea.hbm %s6, %s1233
          %s1235 = sshll.u32 %s1225, 4
          %s1236 = int_to_ptr.vmem [resolvable:$true] %s1235
          %1241 = dma.vmem_to_hbm [thread:$0]  %s1236, 256, %s1234, %s1222, 128, 128, 8
        $region48: #{tpu_custom_call.1} parent=43 // pred_fallthru
          _
      $region44: #{tpu_custom_call.1} parent=5 // pred_fallthru
        _
      %p1242 = scmp.le.s32.totalorder 2, %s15
      // Predicated region
      $region49: #{tpu_custom_call.1} parent=5 // pred_check
        %p1243 = pneg %p1242
      $region50: #{tpu_custom_call.1} parent=5 // pred_check_branch
        %1245 = sbr.rel (%p1243) target = $region52
      $region51: #{tpu_custom_call.1} parent=5 // pred_region
        %s1246 = ssub.s32 %s15, 2
        // Predicated region
        $region53: #{tpu_custom_call.1} parent=51 // pred_check
          %p1247 = pneg %p185
        $region54: #{tpu_custom_call.1} parent=51 // pred_check_branch
          %1249 = sbr.rel (%p1247) target = $region56
        $region55: #{tpu_custom_call.1} parent=51 // pred_region
          %s1250 = sand.u32 %s170, 1
          %s1251 = scalar_lea.sflag [#allocation4], %s1250
          %s1252 = sand.u32 %s170, 1
          %s1253 = smul.addr %s1252, 16
          %s1254 = scalar_lea.vmem [#allocation3], %s1253
          %1255 = dma.done %s1251, 256
        $region56: #{tpu_custom_call.1} parent=51 // pred_fallthru
          _
      $region52: #{tpu_custom_call.1} parent=5 // pred_fallthru
        _
    $region6: #{tpu_custom_call.1} parent=1 // loop_footer
      %s19 = sadd.s32 1, %s15
    $region7: #{tpu_custom_call.1} parent=1 // loop_footer_branch
      %14 = sbr.rel target = $region3
    $region8: #{tpu_custom_call.1} parent=1 // loop_exit
      _
    %1256 = vsyncpa [#allocation4], 1
    %s1257 = scalar_lea.sflag [#allocation4], 1
    %1258 = vsyncpa %s1257, 1

</llo_original>
